<compile_context>
chip_gen: v6e
topology: v6e:2x2x1
jax: 0.10.0
libtpu: 0.0.40
codegen_flags: <defaults>
</compile_context>

<pallas_src>
import functools

import jax
import jax.numpy as jnp
from jax.experimental import pallas as pl
from jax.experimental.pallas import tpu as pltpu


# ---------------------------------------------------------------------------
# Small helpers
# ---------------------------------------------------------------------------
def _round_up(x, m):
    return ((x + m - 1) // m) * m


def _pick_tile(dim, cap):
    """Largest multiple of 128 that divides `dim` (a multiple of 128) and is <= cap."""
    best = 128
    t = 128
    while t <= min(cap, dim):
        if dim % t == 0:
            best = t
        t += 128
    return best


# ---------------------------------------------------------------------------
# Pallas kernels
# ---------------------------------------------------------------------------
def _feat_transform_kernel(x_ref, w_ref, h_ref):
    # H tile = x tile @ W_r   (bf16 operands, f32 MXU accumulation, bf16 store)
    h_ref[...] = jnp.dot(
        x_ref[...], w_ref[...], preferred_element_type=jnp.float32
    ).astype(h_ref.dtype)


def _aggregate_kernel(a_ref, hrel_ref, hroot_ref, o_ref, acc_ref, *,
                      apply_relu: bool, ones_col, tile_k: int, h_resident: bool):
    # out tile = H_root[d-tile] + sum_k A_flat[d-tile, k-tile] @ H_rel[k-tile]
    k = pl.program_id(1)

    @pl.when(k == 0)
    def _():
        # Root transform (+ folded bias) initializes the accumulator -> added once.
        acc_ref[...] = hroot_ref[...].astype(jnp.float32)

    if h_resident:
        start = pl.multiple_of(k * tile_k, tile_k)
        h_chunk = hrel_ref[pl.ds(start, tile_k), :]
    else:
        h_chunk = hrel_ref[...]

    acc_ref[...] += jnp.dot(a_ref[...], h_chunk, preferred_element_type=jnp.float32)

    @pl.when(k == pl.num_programs(1) - 1)
    def _():
        res = acc_ref[...]
        if apply_relu:
            res = jnp.maximum(res, 0.0)
        if ones_col is not None:
            # Emit next layer's input directly: set the bias ones-column.
            col = jax.lax.broadcasted_iota(jnp.int32, res.shape, 1)
            res = jnp.where(col == ones_col, jnp.float32(1.0), res)
        o_ref[...] = res.astype(o_ref.dtype)


# ---------------------------------------------------------------------------
# One RGCN layer = two pallas_calls (feature transform, then the aggregation matmul)
# ---------------------------------------------------------------------------
def rgcn_conv_pallas(x_pad, a_flat, w_stack, *, apply_relu, ones_col, out_dtype):
    """x_pad:  [N_pad, f_in_pad]  bf16 (ones column folded in for the bias)
       a_flat: [N_pad, R*N_pad]   bf16 (mean-normalized relational adjacency) or None
       w_stack:[R+1, f_in_pad, f_out_ext] bf16 (slices 0..R-1 = W_r, slice R = W_root+bias)
       returns [N_pad, f_out_ext] of out_dtype (bf16 w/ ones col for hidden, f32 last)
    """
    n_pad, f_in_pad = x_pad.shape
    r1, _, f_out_ext = w_stack.shape
    num_rel = r1 - 1

    # ---- Stage 1: H_all[r*N_pad + j, :] = x[j] @ W_stack[r]  (root last) -------------
    tile_n = _pick_tile(n_pad, 512)
    n_i = n_pad // tile_n

    h_all = pl.pallas_call(
        _feat_transform_kernel,
        out_shape=jax.ShapeDtypeStruct((r1 * n_pad, f_out_ext), jnp.bfloat16),
        grid_spec=pltpu.PrefetchScalarGridSpec(
            num_scalar_prefetch=0,
            grid=(n_i, r1),  # relations innermost -> x tile stays VMEM-resident across r
            in_specs=[
                pl.BlockSpec((tile_n, f_in_pad), lambda i, r: (i, 0)),             # x tile
                pl.BlockSpec((None, f_in_pad, f_out_ext), lambda i, r: (r, 0, 0)),  # W_r
            ],
            out_specs=pl.BlockSpec((tile_n, f_out_ext), lambda i, r: (r * n_i + i, 0)),
        ),
        compiler_params=pltpu.CompilerParams(
            dimension_semantics=("parallel", "parallel")
        ),
    )(x_pad, w_stack)

    if num_rel == 0 or a_flat is None:
        # Degenerate case (no relations): output is just the root transform.
        res = h_all[:n_pad].astype(jnp.float32)
        if apply_relu:
            res = jnp.maximum(res, 0.0)
        if ones_col is not None:
            res = res.at[:, ones_col].set(1.0)
        return res.astype(out_dtype)

    # ---- Stage 2: out = H_root + A_flat @ H_rel  (K = R*N_pad) -----------------------
    k_total = a_flat.shape[1]
    assert k_total == num_rel * n_pad

    cap_dst = 512
    if n_pad >= 256:
        cap_dst = min(cap_dst, n_pad // 2)   # keep >=2 dst tiles (v7x megacore sharding)
    tile_dst = _pick_tile(n_pad, cap_dst)
    tile_k = _pick_tile(k_total, 2048)

    # Keep H_rel resident in VMEM when it fits a small budget (loads once, no re-stream).
    h_resident = (k_total * f_out_ext * 2) <= (6 << 20)
    if h_resident:
        hrel_spec = pl.BlockSpec((k_total, f_out_ext), lambda d, k: (0, 0))
    else:
        hrel_spec = pl.BlockSpec((tile_k, f_out_ext), lambda d, k: (k, 0))

    root_block_off = num_rel * (n_pad // tile_dst)
    hroot_spec = pl.BlockSpec(
        (tile_dst, f_out_ext), lambda d, k: (root_block_off + d, 0)
    )

    # VMEM budget estimate (double-buffered inputs/outputs + f32 accumulator).
    itemsize_out = jnp.dtype(out_dtype).itemsize
    est = (2 * tile_dst * tile_k * 2
           + 2 * (k_total if h_resident else tile_k) * f_out_ext * 2
           + 2 * tile_dst * f_out_ext * 2
           + 2 * tile_dst * f_out_ext * itemsize_out
           + tile_dst * f_out_ext * 4)
    vmem_limit = int(min(max(est + (8 << 20), 32 << 20), 48 << 20))

    kernel = functools.partial(
        _aggregate_kernel, apply_relu=apply_relu, ones_col=ones_col,
        tile_k=tile_k, h_resident=h_resident,
    )

    out = pl.pallas_call(
        kernel,
        out_shape=jax.ShapeDtypeStruct((n_pad, f_out_ext), out_dtype),
        grid_spec=pltpu.PrefetchScalarGridSpec(
            num_scalar_prefetch=0,
            grid=(n_pad // tile_dst, k_total // tile_k),
            in_specs=[
                pl.BlockSpec((tile_dst, tile_k), lambda d, k: (d, k)),  # A_flat tile
                hrel_spec,                                              # H_rel (relations)
                hroot_spec,                                             # H_root dst tile
            ],
            out_specs=pl.BlockSpec((tile_dst, f_out_ext), lambda d, k: (d, 0)),
            scratch_shapes=[pltpu.VMEM((tile_dst, f_out_ext), jnp.float32)],
        ),
        compiler_params=pltpu.CompilerParams(
            dimension_semantics=("parallel", "arbitrary"),
            vmem_limit_bytes=vmem_limit,
        ),
    )(a_flat, h_all, h_all)
    return out


# ---------------------------------------------------------------------------
# Host-side (plain JAX, runs under the same jit) data preparation
# ---------------------------------------------------------------------------
def build_adjacency_flat(edge_index, edge_type, num_relations, n_pad):
    """Dense mean-normalized adjacency built directly in the flat layout:
    A_flat[d, r*N_pad + s] = 1/deg_r(d) for each edge s->d of relation r."""
    src, dst = edge_index[0], edge_index[1]
    a = jnp.zeros((n_pad, num_relations * n_pad), jnp.float32)
    a = a.at[dst, edge_type * n_pad + src].add(1.0)
    a3 = a.reshape(n_pad, num_relations, n_pad)
    deg = a3.sum(axis=2, keepdims=True)               # in-degree per relation
    a3 = a3 / jnp.maximum(deg, 1.0)                   # mean aggregation (0 for isolated)
    # TODO(synk): bf16 rounds 1/deg; for tighter accuracy keep a f32 deg_inv vector and
    # rescale in-kernel (pairs with an int8/fp8 0-1 adjacency for halved HBM traffic).
    return a3.reshape(n_pad, num_relations * n_pad).astype(jnp.bfloat16)


def _prep_input(x, f_valid, n_pad):
    """Pad features to [N_pad, round_up(f_valid+1,128)] bf16 with a ones column at
    index f_valid (bias folding). Only needed for the first layer."""
    rows = x.shape[0]
    f_pad = _round_up(f_valid + 1, 128)
    out = jnp.zeros((n_pad, f_pad), jnp.float32)
    out = out.at[:rows, :f_valid].set(x[:, :f_valid].astype(jnp.float32))
    out = out.at[:, f_valid].set(1.0)
    return out.astype(jnp.bfloat16)


def _prep_weights(w_rel, w_root, bias, f_in, f_out, f_out_ext):
    """Stack [W_rel_0..W_rel_{R-1}, W_root] -> [R+1, f_in_pad, f_out_ext] bf16,
    folding the bias into the extra input row (index f_in) of the root slice."""
    num_rel = w_rel.shape[0]
    f_in_pad = _round_up(f_in + 1, 128)
    w = jnp.zeros((num_rel + 1, f_in_pad, f_out_ext), jnp.float32)
    if num_rel > 0:
        w = w.at[:num_rel, :f_in, :f_out].set(w_rel)
    w = w.at[num_rel, :f_in, :f_out].set(w_root)
    w = w.at[num_rel, f_in, :f_out].set(bias)
    return w.astype(jnp.bfloat16)


# ---------------------------------------------------------------------------
# Full RGCN module (2 layers, eval mode)
# ---------------------------------------------------------------------------
def init_rgcn_params(key, in_channels, hidden_channels, out_channels,
                     num_relations, num_layers):
    dims = [in_channels] + [hidden_channels] * (num_layers - 1) + [out_channels]
    params = []
    for i in range(num_layers):
        f_in, f_out = dims[i], dims[i + 1]
        key, k1, k2 = jax.random.split(key, 3)
        scale = (2.0 / (f_in + f_out)) ** 0.5
        w_rel = jax.random.normal(k1, (num_relations, f_in, f_out), jnp.float32) * scale
        w_root = jax.random.normal(k2, (f_in, f_out), jnp.float32) * scale
        bias = jnp.zeros((f_out,), jnp.float32)
        params.append((w_rel, w_root, bias))
    return params


@functools.partial(jax.jit, static_argnames=("num_relations",))
def rgcn_forward(params, x, edge_index, edge_type, *, num_relations):
    num_nodes, in_ch = x.shape
    n_pad = _round_up(num_nodes, 128)
    a_flat = (build_adjacency_flat(edge_index, edge_type, num_relations, n_pad)
              if num_relations > 0 else None)

    num_layers = len(params)
    h = _prep_input(x, in_ch, n_pad)
    f_valid = in_ch
    for i, (w_rel, w_root, bias) in enumerate(params):
        f_out = w_root.shape[1]
        last = (i == num_layers - 1)
        f_out_ext = _round_up(f_out + (0 if last else 1), 128)
        w_stack = _prep_weights(w_rel, w_root, bias, f_valid, f_out, f_out_ext)
        h = rgcn_conv_pallas(
            h, a_flat, w_stack,
            apply_relu=not last,
            ones_col=None if last else f_out,
            out_dtype=jnp.float32 if last else jnp.bfloat16,
        )
        # dropout: identity in eval mode (training=False)
        f_valid = f_out
    return h[:num_nodes, :f_valid]   # == self.embedding_output


# ---------------------------------------------------------------------------
# References
# ---------------------------------------------------------------------------
def rgcn_forward_ref_bf16(params, x, edge_index, edge_type, num_relations):
    """Pure-JAX reference mirroring the kernel's exact bf16-in / f32-accumulate numerics."""
    num_nodes, in_ch = x.shape
    n_pad = _round_up(num_nodes, 128)
    a_flat = (build_adjacency_flat(edge_index, edge_type, num_relations, n_pad)
              if num_relations > 0 else None)
    num_layers = len(params)
    h = _prep_input(x, in_ch, n_pad)
    f_valid = in_ch
    for i, (w_rel, w_root, bias) in enumerate(params):
        f_out = w_root.shape[1]
        last = (i == num_layers - 1)
        f_out_ext = _round_up(f_out + (0 if last else 1), 128)
        w_stack = _prep_weights(w_rel, w_root, bias, f_valid, f_out, f_out_ext)
        r1 = w_stack.shape[0]
        h_all = jnp.concatenate(
            [jnp.dot(h, w_stack[r], preferred_element_type=jnp.float32)
             .astype(jnp.bfloat16) for r in range(r1)], axis=0)
        res = h_all[num_relations * n_pad:].astype(jnp.float32)
        if num_relations > 0:
            h_rel = h_all[:num_relations * n_pad]
            res = res + jnp.dot(a_flat, h_rel, preferred_element_type=jnp.float32)
        if not last:
            res = jnp.maximum(res, 0.0)
            res = res.at[:, f_out].set(1.0)
            h = res.astype(jnp.bfloat16)
        else:
            h = res
        f_valid = f_out
    return h[:num_nodes, :f_valid]


def rgcn_forward_ref_f32(params, x, edge_index, edge_type, num_relations):
    """Full-precision reference of the module semantics (loose tolerance vs bf16 kernel)."""
    num_nodes = x.shape[0]
    src, dst = edge_index[0], edge_index[1]
    a = jnp.zeros((num_relations, num_nodes, num_nodes), jnp.float32)
    a = a.at[edge_type, dst, src].add(1.0)
    deg = a.sum(axis=2, keepdims=True)
    a = a / jnp.maximum(deg, 1.0)
    h = x
    num_layers = len(params)
    for i, (w_rel, w_root, bias) in enumerate(params):
        out = h @ w_root + bias[None, :]
        for r in range(num_relations):
            out = out + a[r] @ (h @ w_rel[r])
        if i < num_layers - 1:
            out = jnp.maximum(out, 0.0)
        h = out
    return h


if __name__ == "__main__":
    key = jax.random.PRNGKey(0)

    # Small graph: 16 nodes, 8 input features, 32 hidden, 16 output, 2 relations.
    num_nodes, in_ch, hid_ch, out_ch = 16, 8, 32, 16
    num_relations, num_layers, num_edges = 2, 2, 48

    key, kx, ke_s, ke_d, ke_t, kp = jax.random.split(key, 6)
    x = jax.random.normal(kx, (num_nodes, in_ch), jnp.float32)
    edge_src = jax.random.randint(ke_s, (num_edges,), 0, num_nodes)
    edge_dst = jax.random.randint(ke_d, (num_edges,), 0, num_nodes)
    edge_index = jnp.stack([edge_src, edge_dst], axis=0)           # [2, E]
    edge_type = jax.random.randint(ke_t, (num_edges,), 0, num_relations)

    params = init_rgcn_params(kp, in_ch, hid_ch, out_ch, num_relations, num_layers)

    out = rgcn_forward(params, x, edge_index, edge_type, num_relations=num_relations)
    out = jax.block_until_ready(out)
    assert out.shape == (num_nodes, out_ch)

    ref_bf16 = rgcn_forward_ref_bf16(params, x, edge_index, edge_type, num_relations)
    assert jnp.allclose(out, ref_bf16, atol=1e-2, rtol=1e-2), "mismatch vs bf16 reference"

    ref_f32 = rgcn_forward_ref_f32(params, x, edge_index, edge_type, num_relations)
    assert jnp.allclose(out, ref_f32, atol=2.5e-1, rtol=1e-1), "mismatch vs f32 semantics"

    print("KERNEL_OK")
</pallas_src>

<mosaic_0001>
module attributes {stable_mosaic.version = 11 : i64} {
  func.func private @main(%arg0: i32) attributes {dimension_semantics = [#tpu.dimension_semantics<core_parallel>], iteration_bounds = array<i64: 2>, tpu.core_type = #tpu.core_type<sc_scalar_subcore>, window_params = []} {
    return
  }
}

module attributes {stable_mosaic.version = 11 : i64} {
  func.func private @main(%arg0: i32) attributes {dimension_semantics = [#tpu.dimension_semantics<core_parallel>], iteration_bounds = array<i64: 2>, tpu.core_type = #tpu.core_type<sc_scalar_subcore>, window_params = []} {
    return
  }
}

module attributes {stable_mosaic.version = 11 : i64} {
  func.func @_feat_transform_kernel(%arg0: i32, %arg1: i32, %arg2: memref<128x128xbf16, #tpu.memory_space<vmem>>, %arg3: memref<1x128x128xbf16, #tpu.memory_space<vmem>>, %arg4: memref<128x128xbf16, #tpu.memory_space<vmem>>) attributes {dimension_semantics = [#tpu.dimension_semantics<parallel>, #tpu.dimension_semantics<parallel>], iteration_bounds = array<i64: 1, 3>, scalar_prefetch = 0 : i64, scratch_operands = 0 : i64, tpu.core_type = #tpu.core_type<tc>, window_params = [{transform_indices = @transform_0, window_bounds = array<i64: 128, 128>}, {transform_indices = @transform_1, window_bounds = array<i64: 1, 128, 128>}, {transform_indices = @transform_2, window_bounds = array<i64: 128, 128>}]} {
    %c0 = arith.constant 0 : index
    %c0_0 = arith.constant 0 : index
    %0 = vector.load %arg2[%c0, %c0_0] : memref<128x128xbf16, #tpu.memory_space<vmem>>, vector<128x128xbf16>
    %c0_1 = arith.constant 0 : index
    %c0_2 = arith.constant 0 : index
    %c0_3 = arith.constant 0 : index
    %1 = vector.load %arg3[%c0_1, %c0_2, %c0_3] : memref<1x128x128xbf16, #tpu.memory_space<vmem>>, vector<1x128x128xbf16>
    %2 = vector.shape_cast %1 : vector<1x128x128xbf16> to vector<128x128xbf16>
    %cst = arith.constant dense<0.000000e+00> : vector<128x128xf32>
    %3 = tpu.matmul %0, %2, %cst {dimension_numbers = #tpu.dot_dimension_numbers<[1], [0], [0], [1], [0, 0, 1, 1], [], []>} : vector<128x128xbf16>, vector<128x128xbf16>, vector<128x128xf32> -> vector<128x128xf32>
    %4 = arith.truncf %3 : vector<128x128xf32> to vector<128x128xbf16>
    %c0_4 = arith.constant 0 : index
    %c0_5 = arith.constant 0 : index
    %5 = vector.load %arg4[%c0_4, %c0_5] : memref<128x128xbf16, #tpu.memory_space<vmem>>, vector<128x128xbf16>
    tpu.vector_store %arg4[%c0_4, %c0_5], %4 {strides = array<i32>} : memref<128x128xbf16, #tpu.memory_space<vmem>>, vector<128x128xbf16>,
    return
  }
  func.func @transform_0(%arg0: i32, %arg1: i32) -> (i32, i32) {
    %c0_i32 = arith.constant 0 : i32
    %c0_i32_0 = arith.constant 0 : i32
    return %arg0, %c0_i32 : i32, i32
  }
  func.func @transform_1(%arg0: i32, %arg1: i32) -> (i32, i32, i32) {
    %c0_i32 = arith.constant 0 : i32
    %c0_i32_0 = arith.constant 0 : i32
    %c0_i32_1 = arith.constant 0 : i32
    return %arg1, %c0_i32, %c0_i32_0 : i32, i32, i32
  }
  func.func @transform_2(%arg0: i32, %arg1: i32) -> (i32, i32) {
    %c1_i32 = arith.constant 1 : i32
    %0 = arith.muli %arg1, %c1_i32 : i32
    %1 = arith.addi %0, %arg0 : i32
    %c0_i32 = arith.constant 0 : i32
    %c0_i32_0 = arith.constant 0 : i32
    return %1, %c0_i32 : i32, i32
  }
}

module attributes {stable_mosaic.version = 11 : i64} {
  func.func @_aggregate_kernel(%arg0: i32, %arg1: i32, %arg2: memref<128x256xbf16, #tpu.memory_space<vmem>>, %arg3: memref<256x128xbf16, #tpu.memory_space<vmem>>, %arg4: memref<128x128xbf16, #tpu.memory_space<vmem>>, %arg5: memref<128x128xbf16, #tpu.memory_space<vmem>>, %arg6: memref<128x128xf32, #tpu.memory_space<vmem>>) attributes {dimension_semantics = [#tpu.dimension_semantics<parallel>, #tpu.dimension_semantics<arbitrary>], iteration_bounds = array<i64: 1, 1>, scalar_prefetch = 0 : i64, scratch_operands = 1 : i64, tpu.core_type = #tpu.core_type<tc>, window_params = [{transform_indices = @transform_0, window_bounds = array<i64: 128, 256>}, {transform_indices = @transform_1, window_bounds = array<i64: 256, 128>}, {transform_indices = @transform_2, window_bounds = array<i64: 128, 128>}, {transform_indices = @transform_3, window_bounds = array<i64: 128, 128>}]} {
    %c0_i32 = arith.constant 0 : i32
    %0 = arith.cmpi eq, %arg1, %c0_i32 : i32
    %1 = arith.extui %0 : i1 to i32
    %c0_i32_0 = arith.constant 0 : i32
    %2 = arith.cmpi ne, %1, %c0_i32_0 : i32
    scf.if %2 {
      %c0_9 = arith.constant 0 : index
      %c0_10 = arith.constant 0 : index
      %15 = vector.load %arg4[%c0_9, %c0_10] : memref<128x128xbf16, #tpu.memory_space<vmem>>, vector<128x128xbf16>
      %16 = arith.extf %15 : vector<128x128xbf16> to vector<128x128xf32>
      %c0_11 = arith.constant 0 : index
      %c0_12 = arith.constant 0 : index
      %17 = vector.load %arg6[%c0_11, %c0_12] : memref<128x128xf32, #tpu.memory_space<vmem>>, vector<128x128xf32>
      tpu.vector_store %arg6[%c0_11, %c0_12], %16 {strides = array<i32>} : memref<128x128xf32, #tpu.memory_space<vmem>>, vector<128x128xf32>,
    } else {
    }
    %c256_i32 = arith.constant 256 : i32
    %3 = arith.muli %arg1, %c256_i32 : i32
    %4 = tpu.assume_multiple %3, 256 : i32
    %5 = arith.index_cast %4 : i32 to index
    %c0 = arith.constant 0 : index
    %6 = vector.load %arg3[%5, %c0] : memref<256x128xbf16, #tpu.memory_space<vmem>>, vector<256x128xbf16>
    %c0_1 = arith.constant 0 : index
    %c0_2 = arith.constant 0 : index
    %7 = vector.load %arg6[%c0_1, %c0_2] : memref<128x128xf32, #tpu.memory_space<vmem>>, vector<128x128xf32>
    %c0_3 = arith.constant 0 : index
    %c0_4 = arith.constant 0 : index
    %8 = vector.load %arg2[%c0_3, %c0_4] : memref<128x256xbf16, #tpu.memory_space<vmem>>, vector<128x256xbf16>
    %cst = arith.constant dense<0.000000e+00> : vector<128x128xf32>
    %9 = tpu.matmul %8, %6, %cst {dimension_numbers = #tpu.dot_dimension_numbers<[1], [0], [0], [1], [0, 0, 1, 1], [], []>} : vector<128x256xbf16>, vector<256x128xbf16>, vector<128x128xf32> -> vector<128x128xf32>
    %10 = arith.addf %7, %9 : vector<128x128xf32>
    %c0_5 = arith.constant 0 : index
    %c0_6 = arith.constant 0 : index
    %11 = vector.load %arg6[%c0_5, %c0_6] : memref<128x128xf32, #tpu.memory_space<vmem>>, vector<128x128xf32>
    tpu.vector_store %arg6[%c0_5, %c0_6], %10 {strides = array<i32>} : memref<128x128xf32, #tpu.memory_space<vmem>>, vector<128x128xf32>,
    %c0_i32_7 = arith.constant 0 : i32
    %12 = arith.cmpi eq, %arg1, %c0_i32_7 : i32
    %13 = arith.extui %12 : i1 to i32
    %c0_i32_8 = arith.constant 0 : i32
    %14 = arith.cmpi ne, %13, %c0_i32_8 : i32
    scf.if %14 {
      %c0_9 = arith.constant 0 : index
      %c0_10 = arith.constant 0 : index
      %15 = vector.load %arg6[%c0_9, %c0_10] : memref<128x128xf32, #tpu.memory_space<vmem>>, vector<128x128xf32>
      %cst_11 = arith.constant 0.000000e+00 : f32
      %16 = vector.broadcast %cst_11 : f32 to vector<128x128xf32>
      %17 = arith.maximumf %15, %16 : vector<128x128xf32>
      %18 = tpu.iota {dimensions = array<i32: 1>} : vector<128x128xi32>
      %c32_i32 = arith.constant 32 : i32
      %19 = vector.broadcast %c32_i32 : i32 to vector<128x128xi32>
      %20 = arith.cmpi eq, %18, %19 : vector<128x128xi32>
      %cst_12 = arith.constant 1.000000e+00 : f32
      %21 = vector.broadcast %cst_12 : f32 to vector<128x128xf32>
      %22 = arith.select %20, %21, %17 : vector<128x128xi1>, vector<128x128xf32>
      %23 = arith.truncf %22 : vector<128x128xf32> to vector<128x128xbf16>
      %c0_13 = arith.constant 0 : index
      %c0_14 = arith.constant 0 : index
      %24 = vector.load %arg5[%c0_13, %c0_14] : memref<128x128xbf16, #tpu.memory_space<vmem>>, vector<128x128xbf16>
      tpu.vector_store %arg5[%c0_13, %c0_14], %23 {strides = array<i32>} : memref<128x128xbf16, #tpu.memory_space<vmem>>, vector<128x128xbf16>,
    } else {
    }
    return
  }
  func.func @transform_0(%arg0: i32, %arg1: i32) -> (i32, i32) {
    %c0_i32 = arith.constant 0 : i32
    return %arg0, %arg1 : i32, i32
  }
  func.func @transform_1(%arg0: i32, %arg1: i32) -> (i32, i32) {
    %c0_i32 = arith.constant 0 : i32
    %c0_i32_0 = arith.constant 0 : i32
    %c0_i32_1 = arith.constant 0 : i32
    return %c0_i32, %c0_i32_0 : i32, i32
  }
  func.func @transform_2(%arg0: i32, %arg1: i32) -> (i32, i32) {
    %c2_i32 = arith.constant 2 : i32
    %0 = arith.addi %c2_i32, %arg0 : i32
    %c0_i32 = arith.constant 0 : i32
    %c0_i32_0 = arith.constant 0 : i32
    return %0, %c0_i32 : i32, i32
  }
  func.func @transform_3(%arg0: i32, %arg1: i32) -> (i32, i32) {
    %c0_i32 = arith.constant 0 : i32
    %c0_i32_0 = arith.constant 0 : i32
    return %arg0, %c0_i32 : i32, i32
  }
}

module attributes {stable_mosaic.version = 11 : i64} {
  func.func @_aggregate_kernel(%arg0: i32, %arg1: i32, %arg2: memref<128x256xbf16, #tpu.memory_space<vmem>>, %arg3: memref<256x128xbf16, #tpu.memory_space<vmem>>, %arg4: memref<128x128xbf16, #tpu.memory_space<vmem>>, %arg5: memref<128x128xf32, #tpu.memory_space<vmem>>, %arg6: memref<128x128xf32, #tpu.memory_space<vmem>>) attributes {dimension_semantics = [#tpu.dimension_semantics<parallel>, #tpu.dimension_semantics<arbitrary>], iteration_bounds = array<i64: 1, 1>, scalar_prefetch = 0 : i64, scratch_operands = 1 : i64, tpu.core_type = #tpu.core_type<tc>, window_params = [{transform_indices = @transform_0, window_bounds = array<i64: 128, 256>}, {transform_indices = @transform_1, window_bounds = array<i64: 256, 128>}, {transform_indices = @transform_2, window_bounds = array<i64: 128, 128>}, {transform_indices = @transform_3, window_bounds = array<i64: 128, 128>}]} {
    %c0_i32 = arith.constant 0 : i32
    %0 = arith.cmpi eq, %arg1, %c0_i32 : i32
    %1 = arith.extui %0 : i1 to i32
    %c0_i32_0 = arith.constant 0 : i32
    %2 = arith.cmpi ne, %1, %c0_i32_0 : i32
    scf.if %2 {
      %c0_9 = arith.constant 0 : index
      %c0_10 = arith.constant 0 : index
      %15 = vector.load %arg4[%c0_9, %c0_10] : memref<128x128xbf16, #tpu.memory_space<vmem>>, vector<128x128xbf16>
      %16 = arith.extf %15 : vector<128x128xbf16> to vector<128x128xf32>
      %c0_11 = arith.constant 0 : index
      %c0_12 = arith.constant 0 : index
      %17 = vector.load %arg6[%c0_11, %c0_12] : memref<128x128xf32, #tpu.memory_space<vmem>>, vector<128x128xf32>
      tpu.vector_store %arg6[%c0_11, %c0_12], %16 {strides = array<i32>} : memref<128x128xf32, #tpu.memory_space<vmem>>, vector<128x128xf32>,
    } else {
    }
    %c256_i32 = arith.constant 256 : i32
    %3 = arith.muli %arg1, %c256_i32 : i32
    %4 = tpu.assume_multiple %3, 256 : i32
    %5 = arith.index_cast %4 : i32 to index
    %c0 = arith.constant 0 : index
    %6 = vector.load %arg3[%5, %c0] : memref<256x128xbf16, #tpu.memory_space<vmem>>, vector<256x128xbf16>
    %c0_1 = arith.constant 0 : index
    %c0_2 = arith.constant 0 : index
    %7 = vector.load %arg6[%c0_1, %c0_2] : memref<128x128xf32, #tpu.memory_space<vmem>>, vector<128x128xf32>
    %c0_3 = arith.constant 0 : index
    %c0_4 = arith.constant 0 : index
    %8 = vector.load %arg2[%c0_3, %c0_4] : memref<128x256xbf16, #tpu.memory_space<vmem>>, vector<128x256xbf16>
    %cst = arith.constant dense<0.000000e+00> : vector<128x128xf32>
    %9 = tpu.matmul %8, %6, %cst {dimension_numbers = #tpu.dot_dimension_numbers<[1], [0], [0], [1], [0, 0, 1, 1], [], []>} : vector<128x256xbf16>, vector<256x128xbf16>, vector<128x128xf32> -> vector<128x128xf32>
    %10 = arith.addf %7, %9 : vector<128x128xf32>
    %c0_5 = arith.constant 0 : index
    %c0_6 = arith.constant 0 : index
    %11 = vector.load %arg6[%c0_5, %c0_6] : memref<128x128xf32, #tpu.memory_space<vmem>>, vector<128x128xf32>
    tpu.vector_store %arg6[%c0_5, %c0_6], %10 {strides = array<i32>} : memref<128x128xf32, #tpu.memory_space<vmem>>, vector<128x128xf32>,
    %c0_i32_7 = arith.constant 0 : i32
    %12 = arith.cmpi eq, %arg1, %c0_i32_7 : i32
    %13 = arith.extui %12 : i1 to i32
    %c0_i32_8 = arith.constant 0 : i32
    %14 = arith.cmpi ne, %13, %c0_i32_8 : i32
    scf.if %14 {
      %c0_9 = arith.constant 0 : index
      %c0_10 = arith.constant 0 : index
      %15 = vector.load %arg6[%c0_9, %c0_10] : memref<128x128xf32, #tpu.memory_space<vmem>>, vector<128x128xf32>
      %c0_11 = arith.constant 0 : index
      %c0_12 = arith.constant 0 : index
      %16 = vector.load %arg5[%c0_11, %c0_12] : memref<128x128xf32, #tpu.memory_space<vmem>>, vector<128x128xf32>
      tpu.vector_store %arg5[%c0_11, %c0_12], %15 {strides = array<i32>} : memref<128x128xf32, #tpu.memory_space<vmem>>, vector<128x128xf32>,
    } else {
    }
    return
  }
  func.func @transform_0(%arg0: i32, %arg1: i32) -> (i32, i32) {
    %c0_i32 = arith.constant 0 : i32
    return %arg0, %arg1 : i32, i32
  }
  func.func @transform_1(%arg0: i32, %arg1: i32) -> (i32, i32) {
    %c0_i32 = arith.constant 0 : i32
    %c0_i32_0 = arith.constant 0 : i32
    %c0_i32_1 = arith.constant 0 : i32
    return %c0_i32, %c0_i32_0 : i32, i32
  }
  func.func @transform_2(%arg0: i32, %arg1: i32) -> (i32, i32) {
    %c2_i32 = arith.constant 2 : i32
    %0 = arith.addi %c2_i32, %arg0 : i32
    %c0_i32 = arith.constant 0 : i32
    %c0_i32_0 = arith.constant 0 : i32
    return %0, %c0_i32 : i32, i32
  }
  func.func @transform_3(%arg0: i32, %arg1: i32) -> (i32, i32) {
    %c0_i32 = arith.constant 0 : i32
    %c0_i32_0 = arith.constant 0 : i32
    return %arg0, %c0_i32 : i32, i32
  }
}

</mosaic_0001>

<llo_original>
// kernel: rgcn_forward.4
$region0: #{rgcn_forward.4}
  #allocation0 [shape = 'u32[]', space=smem, size = 0x4, offset = 0x4, fixed_abs, tag = 'smem constant byte address 0x4 - core index']
  #allocation1 [shape = 'u32[144,128]{1,0:T(1,128)}', space=vmem, size = 0x12000, scoped, tag = 'internal scratch']
  %s0 = inlined_call_operand.vmem [shape: bf16[128,128], index: 0, kind: input, shape index: {}]
  %s1 = inlined_call_operand.vmem [shape: bf16[3,128,128], index: 1, kind: input, shape index: {}]
  %s2 = inlined_call_operand.vmem [shape: bf16[384,128], index: 2, kind: output, shape index: {}]
  %s3 = sld [smem:[#allocation0]]
  $region41: #{rgcn_forward.4} parent=0
    _
  %s5 = ssub.s32 1, %s3
  %s6 = scalar_select 0, %s5, %s3
  loop: start=0, step=1, limit=5
  $region2: #{rgcn_forward.4} parent=0 // loop_pre_header
    _
  $region3: #{rgcn_forward.4} parent=0 // loop_header
    %s8 = sphi 0, %s12
    %p9 = scmp.ge.s32.totalorder %s8, 5
    %s15 = sphi 0, %s27
    %s16 = sphi 0, %s23
    %s17 = sphi 0, %s15
    %s18 = sphi 0, %s16
    %s19 = sphi 0, %s17
    %s20 = sphi 0, %s18
    %s30 = sphi 0, %s32
    %s33 = sphi 0, %s30
    %s34 = sphi 0, %s33
    %s50 = sphi 0, %s34
    %s56 = sphi 0, %s58
    %s59 = sphi 0, %s56
    %s60 = sphi 0, %s59
    %s76 = sphi 0, %s60
    %s84 = sphi 0, %s86
    %s87 = sphi 0, %s84
    %s88 = sphi 0, %s87
    %s104 = sphi 0, %s88
  $region4: #{rgcn_forward.4} parent=0 // loop_header_branch
    %11 = sbr.rel (%p9) target = $region8
  $region5: #{rgcn_forward.4} parent=0 // loop_body
    %s13 = ssub.s32 %s8, 1
    %s14 = ssub.s32 %s8, 2
    %s21 = sadd.s32 1, %s16
    %p22 = scmp.ge.s32.totalorder %s21, 3
    %s23 = scalar_select %p22, 0, %s21
    %s24 = sadd.s32 1, %s15
    %s25 = scalar_select %p22, %s24, %s15
    %p26 = scmp.ge.s32.totalorder %s25, 1
    %s27 = scalar_select %p26, 0, %s25
    %s28 = ssub.s32 %s15, %s27
    %p29 = scmp.eq.s32.totalorder %s28, 0
    %s31 = sadd.s32 %s30, 1
    %s32 = scalar_select %p29, %s30, %s31
    %p35 = pneg %p29
    %p36 = scmp.eq.s32.totalorder %s8, 2
    %p37 = por %p35, %p36
    %p38 = scmp.ne.s32.totalorder %s30, %s33
    %p39 = scmp.eq.s32.totalorder %s8, 0
    %p40 = por %p38, %p39
    %p41 = scmp.ne.s32.totalorder %s30, %s33
    %p42 = scmp.eq.s32.totalorder %s13, 2
    %p43 = por %p41, %p42
    %p44 = scmp.ne.s32.totalorder %s33, %s34
    %p45 = scmp.eq.s32.totalorder %s13, 0
    %p46 = por %p44, %p45
    %p47 = scmp.ne.s32.totalorder %s33, %s34
    %p48 = scmp.eq.s32.totalorder %s14, 2
    %p49 = por %p47, %p48
    %p51 = scmp.ne.s32.totalorder %s34, %s50
    %p52 = scmp.eq.s32.totalorder %s14, 0
    %p53 = por %p51, %p52
    %s54 = ssub.s32 %s16, %s23
    %p55 = scmp.eq.s32.totalorder %s54, 0
    %s57 = sadd.s32 %s56, 1
    %s58 = scalar_select %p55, %s56, %s57
    %p61 = pneg %p55
    %p62 = scmp.eq.s32.totalorder %s8, 2
    %p63 = por %p61, %p62
    %p64 = scmp.ne.s32.totalorder %s56, %s59
    %p65 = scmp.eq.s32.totalorder %s8, 0
    %p66 = por %p64, %p65
    %p67 = scmp.ne.s32.totalorder %s56, %s59
    %p68 = scmp.eq.s32.totalorder %s13, 2
    %p69 = por %p67, %p68
    %p70 = scmp.ne.s32.totalorder %s59, %s60
    %p71 = scmp.eq.s32.totalorder %s13, 0
    %p72 = por %p70, %p71
    %p73 = scmp.ne.s32.totalorder %s59, %s60
    %p74 = scmp.eq.s32.totalorder %s14, 2
    %p75 = por %p73, %p74
    %p77 = scmp.ne.s32.totalorder %s60, %s76
    %p78 = scmp.eq.s32.totalorder %s14, 0
    %p79 = por %p77, %p78
    %s80 = sadd.s32 %s16, %s15
    %s81 = sadd.s32 %s23, %s27
    %s82 = ssub.s32 %s80, %s81
    %p83 = scmp.eq.s32.totalorder %s82, 0
    %s85 = sadd.s32 %s84, 1
    %s86 = scalar_select %p83, %s84, %s85
    %p89 = pneg %p83
    %p90 = scmp.eq.s32.totalorder %s8, 2
    %p91 = por %p89, %p90
    %p92 = scmp.ne.s32.totalorder %s84, %s87
    %p93 = scmp.eq.s32.totalorder %s8, 0
    %p94 = por %p92, %p93
    %p95 = scmp.ne.s32.totalorder %s84, %s87
    %p96 = scmp.eq.s32.totalorder %s13, 2
    %p97 = por %p95, %p96
    %p98 = scmp.ne.s32.totalorder %s87, %s88
    %p99 = scmp.eq.s32.totalorder %s13, 0
    %p100 = por %p98, %p99
    %p101 = scmp.ne.s32.totalorder %s87, %s88
    %p102 = scmp.eq.s32.totalorder %s14, 2
    %p103 = por %p101, %p102
    %p105 = scmp.ne.s32.totalorder %s88, %s104
    %p106 = scmp.eq.s32.totalorder %s14, 0
    %p107 = por %p105, %p106
    %p108 = scmp.le.s32.totalorder 1, %s8
    %p109 = scmp.lt.s32.totalorder %s8, 4
    %p110 = pnand %p108, %p109
    %p111 = pneg %p110
    // Predicated region
    $region9: #{rgcn_forward.4} parent=5 // pred_check
      _
    $region10: #{rgcn_forward.4} parent=5 // pred_check_branch
      %113 = sbr.rel (%p110) target = $region12
    $region11: #{rgcn_forward.4} parent=5 // pred_region
      %s114 = ssub.s32 %s8, 1
      // Predicated region
      $region13: #{rgcn_forward.4} parent=11 // pred_check
        %p115 = pneg %p46
      $region14: #{rgcn_forward.4} parent=11 // pred_check_branch
        %117 = sbr.rel (%p115) target = $region16
      $region15: #{rgcn_forward.4} parent=11 // pred_region
        %s118 = smul.u32 16, %s17
        %p119 = scmp.lt.s32.totalorder %s118, 15
        %s120 = scalar_select %p119, %s118, 15
        %s121 = smul.addr %s120, 4
        %s122 = scalar_lea.vmem %s0, %s121
        %s123 = smul.u32 16, %s17
      $region16: #{rgcn_forward.4} parent=11 // pred_fallthru
        _
    $region12: #{rgcn_forward.4} parent=5 // pred_fallthru
      _
    %p124 = scmp.lt.s32.totalorder %s8, 3
    // Predicated region
    $region17: #{rgcn_forward.4} parent=5 // pred_check
      %p125 = pneg %p124
    $region18: #{rgcn_forward.4} parent=5 // pred_check_branch
      %127 = sbr.rel (%p125) target = $region20
    $region19: #{rgcn_forward.4} parent=5 // pred_region
      // Predicated region
      $region21: #{rgcn_forward.4} parent=19 // pred_check
        %p128 = pneg %p66
      $region22: #{rgcn_forward.4} parent=19 // pred_check_branch
        %130 = sbr.rel (%p128) target = $region24
      $region23: #{rgcn_forward.4} parent=19 // pred_region
        %p131 = scmp.lt.s32.totalorder %s16, 2
        %s132 = scalar_select %p131, %s16, 2
        %s133 = smul.addr %s132, 16
        %s134 = smul.addr %s133, 4
        %s135 = scalar_lea.vmem %s1, %s134
      $region24: #{rgcn_forward.4} parent=19 // pred_fallthru
        _
    $region20: #{rgcn_forward.4} parent=5 // pred_fallthru
      _
    %p136 = scmp.le.s32.totalorder 1, %s8
    %p137 = scmp.lt.s32.totalorder %s8, 4
    %p138 = pnand %p136, %p137
    %p139 = pneg %p138
    // Predicated region
    $region25: #{rgcn_forward.4} parent=5 // pred_check
      _
    $region26: #{rgcn_forward.4} parent=5 // pred_check_branch
      %141 = sbr.rel (%p138) target = $region28
    $region27: #{rgcn_forward.4} parent=5 // pred_region
      %s142 = ssub.s32 %s8, 1
      %s143 = smul.u32 16, %s17
      %p144 = scmp.lt.s32.totalorder %s143, 15
      %s145 = scalar_select %p144, %s143, 15
      %s146 = smul.addr %s145, 4
      %s147 = scalar_lea.vmem %s0, %s146
      %p148 = pneg %p46
      %p149 = pneg %p43
      %p150 = scmp.lt.s32.totalorder %s18, 2
      %s151 = scalar_select %p150, %s18, 2
      %s152 = smul.addr %s151, 16
      %s153 = smul.addr %s152, 4
      %s154 = scalar_lea.vmem %s1, %s153
      %p155 = pneg %p72
      %p156 = pneg %p69
      %p157 = pneg %p100
      %p158 = pneg %p97
      %s159 = sadd.s32 %s18, %s17
      %s160 = smul.u32 16, %s159
      %p161 = scmp.lt.s32.totalorder %s160, 47
      %s162 = scalar_select %p161, %s160, 47
      %s163 = smul.addr %s162, 4
      %s164 = scalar_lea.vmem %s2, %s163
      %s165 = smul.u32 16, %s17
      %p166 = scmp.lt.s32.totalorder %s165, 15
      %s167 = scalar_select %p166, %s165, 15
      %s168 = smul.addr %s167, 4
      %s169 = scalar_lea.vmem %s0, %s168
      %s170 = smul.u32 16, %s17
      %p171 = scmp.lt.s32.totalorder %s18, 2
      %s172 = scalar_select %p171, %s18, 2
      %s173 = smul.addr %s172, 16
      %s174 = smul.addr %s173, 4
      %s175 = scalar_lea.vmem %s1, %s174
      %s176 = sadd.s32 %s18, %s17
      %s177 = smul.u32 16, %s176
      %p178 = scmp.lt.s32.totalorder %s177, 47
      %s179 = scalar_select %p178, %s177, 47
      %s180 = smul.addr %s179, 4
      %s181 = scalar_lea.vmem %s2, %s180
      %s182 = sadd.s32 %s18, %s17
      %s183 = smul.u32 16, %s182
      %v185 = vld [vmem:[%s169] sm:$0xf]
      %v186 = vld [vmem:[%s169 + $0x4] sm:$0xf]
      %v187 = vld [vmem:[%s169 + $0x8] sm:$0xf]
      %v188 = vld [vmem:[%s169 + $0xc] sm:$0xf]
      %v189 = vld [vmem:[%s169 + $0x10] sm:$0xf]
      %v190 = vld [vmem:[%s169 + $0x14] sm:$0xf]
      %v191 = vld [vmem:[%s169 + $0x18] sm:$0xf]
      %v192 = vld [vmem:[%s169 + $0x1c] sm:$0xf]
      %v193 = vld [vmem:[%s169 + $0x20] sm:$0xf]
      %v194 = vld [vmem:[%s169 + $0x24] sm:$0xf]
      %v195 = vld [vmem:[%s169 + $0x28] sm:$0xf]
      %v196 = vld [vmem:[%s169 + $0x2c] sm:$0xf]
      %v197 = vld [vmem:[%s169 + $0x30] sm:$0xf]
      %v198 = vld [vmem:[%s169 + $0x34] sm:$0xf]
      %v199 = vld [vmem:[%s169 + $0x38] sm:$0xf]
      %v200 = vld [vmem:[%s169 + $0x3c] sm:$0xf]
      %v201 = vld [vmem:[%s175] sm:$0xf]
      %v202 = vld [vmem:[%s175 + $0x4] sm:$0xf]
      %v203 = vld [vmem:[%s175 + $0x8] sm:$0xf]
      %v204 = vld [vmem:[%s175 + $0xc] sm:$0xf]
      %v205 = vld [vmem:[%s175 + $0x10] sm:$0xf]
      %v206 = vld [vmem:[%s175 + $0x14] sm:$0xf]
      %v207 = vld [vmem:[%s175 + $0x18] sm:$0xf]
      %v208 = vld [vmem:[%s175 + $0x1c] sm:$0xf]
      %v209 = vld [vmem:[%s175 + $0x20] sm:$0xf]
      %v210 = vld [vmem:[%s175 + $0x24] sm:$0xf]
      %v211 = vld [vmem:[%s175 + $0x28] sm:$0xf]
      %v212 = vld [vmem:[%s175 + $0x2c] sm:$0xf]
      %v213 = vld [vmem:[%s175 + $0x30] sm:$0xf]
      %v214 = vld [vmem:[%s175 + $0x34] sm:$0xf]
      %v215 = vld [vmem:[%s175 + $0x38] sm:$0xf]
      %v216 = vld [vmem:[%s175 + $0x3c] sm:$0xf]
      %v233 = vunpack.c.l.b16 %v185
      %v234 = vunpack.c.l.b16 %v186
      %v235 = vunpack.c.l.b16 %v187
      %v236 = vunpack.c.l.b16 %v188
      %v237 = vunpack.c.l.b16 %v189
      %v238 = vunpack.c.l.b16 %v190
      %v239 = vunpack.c.l.b16 %v191
      %v240 = vunpack.c.l.b16 %v192
      %v241 = vunpack.c.l.b16 %v193
      %v242 = vunpack.c.l.b16 %v194
      %v243 = vunpack.c.l.b16 %v195
      %v244 = vunpack.c.l.b16 %v196
      %v245 = vunpack.c.l.b16 %v197
      %v246 = vunpack.c.l.b16 %v198
      %v247 = vunpack.c.l.b16 %v199
      %v248 = vunpack.c.l.b16 %v200
      %v249 = vpack.c.b16 %v234, %v233
      %v250 = vpack.c.b16 %v236, %v235
      %v251 = vpack.c.b16 %v238, %v237
      %v252 = vpack.c.b16 %v240, %v239
      %v253 = vpack.c.b16 %v242, %v241
      %v254 = vpack.c.b16 %v244, %v243
      %v255 = vpack.c.b16 %v246, %v245
      %v256 = vpack.c.b16 %v248, %v247
      %v281 = vunpack.c.l.b16 %v201
      %v282 = vunpack.c.l.b16 %v202
      %v283 = vunpack.c.l.b16 %v203
      %v284 = vunpack.c.l.b16 %v204
      %v285 = vunpack.c.l.b16 %v205
      %v286 = vunpack.c.l.b16 %v206
      %v287 = vunpack.c.l.b16 %v207
      %v288 = vunpack.c.l.b16 %v208
      %v289 = vunpack.c.l.b16 %v209
      %v290 = vunpack.c.l.b16 %v210
      %v291 = vunpack.c.l.b16 %v211
      %v292 = vunpack.c.l.b16 %v212
      %v293 = vunpack.c.l.b16 %v213
      %v294 = vunpack.c.l.b16 %v214
      %v295 = vunpack.c.l.b16 %v215
      %v296 = vunpack.c.l.b16 %v216
      %v297 = vpack.c.b16 %v282, %v281
      %v298 = vpack.c.b16 %v284, %v283
      %v299 = vpack.c.b16 %v286, %v285
      %v300 = vpack.c.b16 %v288, %v287
      %v301 = vpack.c.b16 %v290, %v289
      %v302 = vpack.c.b16 %v292, %v291
      %v303 = vpack.c.b16 %v294, %v293
      %v304 = vpack.c.b16 %v296, %v295
      %313 = vmatprep.subr.bf16.mxu0 0
      %314 = vmatpush1.bf16.msra.mxu0 %v304
      %315 = vmatprep.subr.bf16.mxu0 0
      %316 = vmatpush1.bf16.msra.mxu0 %v303
      %317 = vmatprep.subr.bf16.mxu0 0
      %318 = vmatpush1.bf16.msra.mxu0 %v302
      %319 = vmatprep.subr.bf16.mxu0 0
      %320 = vmatpush1.bf16.msra.mxu0 %v301
      %321 = vmatprep.subr.bf16.mxu0 0
      %322 = vmatpush1.bf16.msra.mxu0 %v300
      %323 = vmatprep.subr.bf16.mxu0 0
      %324 = vmatpush1.bf16.msra.mxu0 %v299
      %325 = vmatprep.subr.bf16.mxu0 0
      %326 = vmatpush1.bf16.msra.mxu0 %v298
      %327 = vmatprep.subr.bf16.mxu0 0
      %328 = vmatpush1.bf16.msra.mxu0 %v297
      %329 = vmatprep.subr.bf16.mxu0 0
      %330 = vmatpush2.bf16.msra.mxu0 0
      %331 = vmatprep.subr.bf16.mxu0 0
      %332 = vmatpush2.bf16.msra.mxu0 0
      %333 = vmatprep.subr.bf16.mxu0 0
      %334 = vmatpush2.bf16.msra.mxu0 0
      %335 = vmatprep.subr.bf16.mxu0 0
      %336 = vmatpush2.bf16.msra.mxu0 0
      %337 = vmatprep.subr.bf16.mxu0 0
      %338 = vmatpush2.bf16.msra.mxu0 0
      %339 = vmatprep.subr.bf16.mxu0 0
      %340 = vmatpush2.bf16.msra.mxu0 0
      %341 = vmatprep.subr.bf16.mxu0 0
      %342 = vmatpush2.bf16.msra.mxu0 0
      %343 = vmatprep.subr.bf16.mxu0 0
      %344 = vmatpush2.bf16.msra.mxu0 0
      %345 = vmatprep.mubr.bf16.mxu0 0
      %346 = vmatmul.mubr.bf16.gmra.mxu0 %v249
      %v347 = vpop.f32.mrf.mxu0
      %v348 = vadd.f32 0.0, %v347
      %v349 = vpop.f32.mrf.mxu0
      %v350 = vpop.f32.mrf.mxu0
      %v351 = vadd.f32 0.0, %v350
      %v352 = vpop.f32.mrf.mxu0
      %353 = vmatprep.mubr.bf16.mxu0 0
      %354 = vmatmul.mubr.bf16.gmra.mxu0 %v250
      %v355 = vpop.f32.mrf.mxu0
      %v356 = vadd.f32 0.0, %v355
      %v357 = vpop.f32.mrf.mxu0
      %v358 = vpop.f32.mrf.mxu0
      %v359 = vadd.f32 0.0, %v358
      %v360 = vpop.f32.mrf.mxu0
      %361 = vmatprep.mubr.bf16.mxu0 0
      %362 = vmatmul.mubr.bf16.gmra.mxu0 %v251
      %v363 = vpop.f32.mrf.mxu0
      %v364 = vadd.f32 0.0, %v363
      %v365 = vpop.f32.mrf.mxu0
      %v366 = vpop.f32.mrf.mxu0
      %v367 = vadd.f32 0.0, %v366
      %v368 = vpop.f32.mrf.mxu0
      %369 = vmatprep.mubr.bf16.mxu0 0
      %370 = vmatmul.mubr.bf16.gmra.mxu0 %v252
      %v371 = vpop.f32.mrf.mxu0
      %v372 = vadd.f32 0.0, %v371
      %v373 = vpop.f32.mrf.mxu0
      %v374 = vpop.f32.mrf.mxu0
      %v375 = vadd.f32 0.0, %v374
      %v376 = vpop.f32.mrf.mxu0
      %377 = vmatprep.mubr.bf16.mxu0 0
      %378 = vmatmul.mubr.bf16.gmra.mxu0 %v253
      %v379 = vpop.f32.mrf.mxu0
      %v380 = vadd.f32 0.0, %v379
      %v381 = vpop.f32.mrf.mxu0
      %v382 = vpop.f32.mrf.mxu0
      %v383 = vadd.f32 0.0, %v382
      %v384 = vpop.f32.mrf.mxu0
      %385 = vmatprep.mubr.bf16.mxu0 0
      %386 = vmatmul.mubr.bf16.gmra.mxu0 %v254
      %v387 = vpop.f32.mrf.mxu0
      %v388 = vadd.f32 0.0, %v387
      %v389 = vpop.f32.mrf.mxu0
      %v390 = vpop.f32.mrf.mxu0
      %v391 = vadd.f32 0.0, %v390
      %v392 = vpop.f32.mrf.mxu0
      %393 = vmatprep.mubr.bf16.mxu0 0
      %394 = vmatmul.mubr.bf16.gmra.mxu0 %v255
      %v395 = vpop.f32.mrf.mxu0
      %v396 = vadd.f32 0.0, %v395
      %v397 = vpop.f32.mrf.mxu0
      %v398 = vpop.f32.mrf.mxu0
      %v399 = vadd.f32 0.0, %v398
      %v400 = vpop.f32.mrf.mxu0
      %401 = vmatprep.mubr.bf16.mxu0 0
      %402 = vmatmul.mubr.bf16.gmra.mxu0 %v256
      %v403 = vpop.f32.mrf.mxu0
      %v404 = vadd.f32 0.0, %v403
      %v405 = vpop.f32.mrf.mxu0
      %v406 = vpop.f32.mrf.mxu0
      %v407 = vadd.f32 0.0, %v406
      %v408 = vpop.f32.mrf.mxu0
      %409 = vdwg.mxu0
      %v410 = vpack.c.bf16 %v351, %v348
      %v411 = vpack.c.bf16 %v359, %v356
      %v412 = vpack.c.bf16 %v367, %v364
      %v413 = vpack.c.bf16 %v375, %v372
      %v414 = vpack.c.bf16 %v383, %v380
      %v415 = vpack.c.bf16 %v391, %v388
      %v416 = vpack.c.bf16 %v399, %v396
      %v417 = vpack.c.bf16 %v407, %v404
      %v426 = vunpack.c.l.b16 %v410
      %v427 = vunpack.c.h.b16 %v410
      %v428 = vunpack.c.l.b16 %v411
      %v429 = vunpack.c.h.b16 %v411
      %v430 = vunpack.c.l.b16 %v412
      %v431 = vunpack.c.h.b16 %v412
      %v432 = vunpack.c.l.b16 %v413
      %v433 = vunpack.c.h.b16 %v413
      %v434 = vunpack.c.l.b16 %v414
      %v435 = vunpack.c.h.b16 %v414
      %v436 = vunpack.c.l.b16 %v415
      %v437 = vunpack.c.h.b16 %v415
      %v438 = vunpack.c.l.b16 %v416
      %v439 = vunpack.c.h.b16 %v416
      %v440 = vunpack.c.l.b16 %v417
      %v441 = vunpack.c.h.b16 %v417
      %v442 = vpack.c.b16 %v426, %v426
      %v443 = vpack.c.b16 %v427, %v427
      %v444 = vpack.c.b16 %v428, %v428
      %v445 = vpack.c.b16 %v429, %v429
      %v446 = vpack.c.b16 %v430, %v430
      %v447 = vpack.c.b16 %v431, %v431
      %v448 = vpack.c.b16 %v432, %v432
      %v449 = vpack.c.b16 %v433, %v433
      %v450 = vpack.c.b16 %v434, %v434
      %v451 = vpack.c.b16 %v435, %v435
      %v452 = vpack.c.b16 %v436, %v436
      %v453 = vpack.c.b16 %v437, %v437
      %v454 = vpack.c.b16 %v438, %v438
      %v455 = vpack.c.b16 %v439, %v439
      %v456 = vpack.c.b16 %v440, %v440
      %v457 = vpack.c.b16 %v441, %v441
      %474 = vst [vmem:[%s181] sm:$0xf] %v442
      %475 = vst [vmem:[%s181 + $0x4] sm:$0xf] %v443
      %476 = vst [vmem:[%s181 + $0x8] sm:$0xf] %v444
      %477 = vst [vmem:[%s181 + $0xc] sm:$0xf] %v445
      %478 = vst [vmem:[%s181 + $0x10] sm:$0xf] %v446
      %479 = vst [vmem:[%s181 + $0x14] sm:$0xf] %v447
      %480 = vst [vmem:[%s181 + $0x18] sm:$0xf] %v448
      %481 = vst [vmem:[%s181 + $0x1c] sm:$0xf] %v449
      %482 = vst [vmem:[%s181 + $0x20] sm:$0xf] %v450
      %483 = vst [vmem:[%s181 + $0x24] sm:$0xf] %v451
      %484 = vst [vmem:[%s181 + $0x28] sm:$0xf] %v452
      %485 = vst [vmem:[%s181 + $0x2c] sm:$0xf] %v453
      %486 = vst [vmem:[%s181 + $0x30] sm:$0xf] %v454
      %487 = vst [vmem:[%s181 + $0x34] sm:$0xf] %v455
      %488 = vst [vmem:[%s181 + $0x38] sm:$0xf] %v456
      %489 = vst [vmem:[%s181 + $0x3c] sm:$0xf] %v457
      %s490 = sadd.s32 %s18, %s17
      %s491 = smul.u32 16, %s490
      %p492 = scmp.lt.s32.totalorder %s491, 47
      %s493 = scalar_select %p492, %s491, 47
      %s494 = smul.addr %s493, 4
      %s495 = scalar_lea.vmem %s2, %s494
      // Predicated region
      $region29: #{rgcn_forward.4} parent=27 // pred_check
        %p496 = pneg %p97
      $region30: #{rgcn_forward.4} parent=27 // pred_check_branch
        %498 = sbr.rel (%p496) target = $region32
      $region31: #{rgcn_forward.4} parent=27 // pred_region
        %s499 = sadd.s32 %s18, %s17
        %s500 = smul.u32 16, %s499
      $region32: #{rgcn_forward.4} parent=27 // pred_fallthru
        _
    $region28: #{rgcn_forward.4} parent=5 // pred_fallthru
      _
    %p501 = scmp.le.s32.totalorder 2, %s8
    // Predicated region
    $region33: #{rgcn_forward.4} parent=5 // pred_check
      %p502 = pneg %p501
    $region34: #{rgcn_forward.4} parent=5 // pred_check_branch
      %504 = sbr.rel (%p502) target = $region36
    $region35: #{rgcn_forward.4} parent=5 // pred_region
      %s505 = ssub.s32 %s8, 2
      // Predicated region
      $region37: #{rgcn_forward.4} parent=35 // pred_check
        %p506 = pneg %p103
      $region38: #{rgcn_forward.4} parent=35 // pred_check_branch
        %508 = sbr.rel (%p506) target = $region40
      $region39: #{rgcn_forward.4} parent=35 // pred_region
        %s509 = sadd.s32 %s20, %s19
        %s510 = smul.u32 16, %s509
        %p511 = scmp.lt.s32.totalorder %s510, 47
        %s512 = scalar_select %p511, %s510, 47
        %s513 = smul.addr %s512, 4
        %s514 = scalar_lea.vmem %s2, %s513
      $region40: #{rgcn_forward.4} parent=35 // pred_fallthru
        _
    $region36: #{rgcn_forward.4} parent=5 // pred_fallthru
      _
  $region6: #{rgcn_forward.4} parent=0 // loop_footer
    %s12 = sadd.s32 1, %s8
  $region7: #{rgcn_forward.4} parent=0 // loop_footer_branch
    %7 = sbr.rel target = $region3
  $region8: #{rgcn_forward.4} parent=0 // loop_exit
    _

// kernel: rgcn_forward.5
$region0: #{rgcn_forward.5}
  #allocation0 [shape = 'u32[]', space=smem, size = 0x4, offset = 0x4, fixed_abs, tag = 'smem constant byte address 0x4 - core index']
  #allocation1 [shape = 'u32[144,128]{1,0:T(1,128)}', space=vmem, size = 0x12000, scoped, tag = 'internal scratch']
  #allocation2 [shape = 'f32[128,128]{1,0:T(8,128)}', space=vmem, size = 0x10000, scoped, tag = 'scratch operand']
  %s0 = inlined_call_operand.vmem [shape: bf16[128,256], index: 0, kind: input, shape index: {}]
  %s1 = inlined_call_operand.vmem [shape: bf16[384,128], index: 1, kind: input, shape index: {}, may-alias: {1,2}]
  %s2 = inlined_call_operand.vmem [shape: bf16[384,128], index: 2, kind: input, shape index: {}, may-alias: {1,2}]
  %s3 = inlined_call_operand.vmem [shape: bf16[128,128], index: 3, kind: output, shape index: {}]
  %s4 = sld [smem:[#allocation0]]
  $region30: #{rgcn_forward.5} parent=0
    _
  %s6 = ssub.s32 1, %s4
  %s7 = scalar_select 0, %s6, %s4
  // Predicated region
  $region2: #{rgcn_forward.5} parent=0 // pred_check
    _
  $region3: #{rgcn_forward.5} parent=0 // pred_check_branch
    %9 = sbr.rel (0) target = $region5
  $region4: #{rgcn_forward.5} parent=0 // pred_region
    _
  $region5: #{rgcn_forward.5} parent=0 // pred_fallthru
    _
  // Predicated region
  $region6: #{rgcn_forward.5} parent=0 // pred_check
    _
  $region7: #{rgcn_forward.5} parent=0 // pred_check_branch
    %11 = sbr.rel (0) target = $region9
  $region8: #{rgcn_forward.5} parent=0 // pred_region
    _
  $region9: #{rgcn_forward.5} parent=0 // pred_fallthru
    _
  // Predicated region
  $region10: #{rgcn_forward.5} parent=0 // pred_check
    _
  $region11: #{rgcn_forward.5} parent=0 // pred_check_branch
    %13 = sbr.rel (0) target = $region13
  $region12: #{rgcn_forward.5} parent=0 // pred_region
    %s14 = sadd.s32 0, 2
    %s15 = smul.u32 16, %s14
    %p16 = scmp.lt.s32.totalorder %s15, 47
    %s17 = scalar_select %p16, %s15, 47
    %s18 = smul.addr %s17, 4
    %s19 = scalar_lea.vmem %s2, %s18
    %s20 = sadd.s32 0, 2
    %s21 = smul.u32 16, %s20
  $region13: #{rgcn_forward.5} parent=0 // pred_fallthru
    _
  %s22 = sadd.s32 0, 2
  %s23 = smul.u32 16, %s22
  %p24 = scmp.lt.s32.totalorder %s23, 47
  %s25 = scalar_select %p24, %s23, 47
  %s26 = smul.addr %s25, 4
  %s27 = scalar_lea.vmem %s2, %s26
  %s28 = sadd.s32 0, 2
  %s29 = smul.u32 16, %s28
  %p30 = scmp.lt.s32.totalorder %s29, 47
  %s31 = scalar_select %p30, %s29, 47
  %s32 = smul.addr %s31, 4
  %s33 = scalar_lea.vmem %s2, %s32
  %s34 = sadd.s32 0, 2
  %s35 = smul.u32 16, %s34
  %p37 = scmp.eq.s32.totalorder 0, 0
  // Predicated region
  $region14: #{rgcn_forward.5} parent=0 // pred_check
    %p38 = pneg %p37
  $region15: #{rgcn_forward.5} parent=0 // pred_check_branch
    %40 = sbr.rel (%p38) target = $region17
  $region16: #{rgcn_forward.5} parent=0 // pred_region
    %v41 = vld [vmem:[%s33] sm:$0xf]
    %v42 = vld [vmem:[%s33 + $0x4] sm:$0xf]
    %v43 = vld [vmem:[%s33 + $0x8] sm:$0xf]
    %v44 = vld [vmem:[%s33 + $0xc] sm:$0xf]
    %v45 = vld [vmem:[%s33 + $0x10] sm:$0xf]
    %v46 = vld [vmem:[%s33 + $0x14] sm:$0xf]
    %v47 = vld [vmem:[%s33 + $0x18] sm:$0xf]
    %v48 = vld [vmem:[%s33 + $0x1c] sm:$0xf]
    %v49 = vld [vmem:[%s33 + $0x20] sm:$0xf]
    %v50 = vld [vmem:[%s33 + $0x24] sm:$0xf]
    %v51 = vld [vmem:[%s33 + $0x28] sm:$0xf]
    %v52 = vld [vmem:[%s33 + $0x2c] sm:$0xf]
    %v53 = vld [vmem:[%s33 + $0x30] sm:$0xf]
    %v54 = vld [vmem:[%s33 + $0x34] sm:$0xf]
    %v55 = vld [vmem:[%s33 + $0x38] sm:$0xf]
    %v56 = vld [vmem:[%s33 + $0x3c] sm:$0xf]
    %v57 = vunpack.c.l.bf16 %v41
    %v58 = vunpack.c.l.bf16 %v42
    %v59 = vunpack.c.l.bf16 %v43
    %v60 = vunpack.c.l.bf16 %v44
    %v61 = vunpack.c.l.bf16 %v45
    %v62 = vunpack.c.l.bf16 %v46
    %v63 = vunpack.c.l.bf16 %v47
    %v64 = vunpack.c.l.bf16 %v48
    %v65 = vunpack.c.l.bf16 %v49
    %v66 = vunpack.c.l.bf16 %v50
    %v67 = vunpack.c.l.bf16 %v51
    %v68 = vunpack.c.l.bf16 %v52
    %v69 = vunpack.c.l.bf16 %v53
    %v70 = vunpack.c.l.bf16 %v54
    %v71 = vunpack.c.l.bf16 %v55
    %v72 = vunpack.c.l.bf16 %v56
    %73 = vst [vmem:[#allocation2] sm:$0xff] %v57
    %74 = vst [vmem:[#allocation2 + $0x8] sm:$0xff] %v58
    %75 = vst [vmem:[#allocation2 + $0x10] sm:$0xff] %v59
    %76 = vst [vmem:[#allocation2 + $0x18] sm:$0xff] %v60
    %77 = vst [vmem:[#allocation2 + $0x20] sm:$0xff] %v61
    %78 = vst [vmem:[#allocation2 + $0x28] sm:$0xff] %v62
    %79 = vst [vmem:[#allocation2 + $0x30] sm:$0xff] %v63
    %80 = vst [vmem:[#allocation2 + $0x38] sm:$0xff] %v64
    %81 = vst [vmem:[#allocation2 + $0x40] sm:$0xff] %v65
    %82 = vst [vmem:[#allocation2 + $0x48] sm:$0xff] %v66
    %83 = vst [vmem:[#allocation2 + $0x50] sm:$0xff] %v67
    %84 = vst [vmem:[#allocation2 + $0x58] sm:$0xff] %v68
    %85 = vst [vmem:[#allocation2 + $0x60] sm:$0xff] %v69
    %86 = vst [vmem:[#allocation2 + $0x68] sm:$0xff] %v70
    %87 = vst [vmem:[#allocation2 + $0x70] sm:$0xff] %v71
    %88 = vst [vmem:[#allocation2 + $0x78] sm:$0xff] %v72
  $region17: #{rgcn_forward.5} parent=0 // pred_fallthru
    _
  %s89 = smul.u32 0, 256
  %s90 = sshra.s32 %s89, 3
  %s91 = sand.u32 %s89, 7
  %s92 = smul.addr %s90, 4
  %s93 = scalar_lea.vmem %s1, %s92
  %v94 = vld [vmem:[%s93] sm:$0xf]
  %v95 = vld [vmem:[%s93 + $0x4] sm:$0xf]
  %v96 = vld [vmem:[%s93 + $0x8] sm:$0xf]
  %v97 = vld [vmem:[%s93 + $0xc] sm:$0xf]
  %v98 = vld [vmem:[%s93 + $0x10] sm:$0xf]
  %v99 = vld [vmem:[%s93 + $0x14] sm:$0xf]
  %v100 = vld [vmem:[%s93 + $0x18] sm:$0xf]
  %v101 = vld [vmem:[%s93 + $0x1c] sm:$0xf]
  %v102 = vld [vmem:[%s93 + $0x20] sm:$0xf]
  %v103 = vld [vmem:[%s93 + $0x24] sm:$0xf]
  %v104 = vld [vmem:[%s93 + $0x28] sm:$0xf]
  %v105 = vld [vmem:[%s93 + $0x2c] sm:$0xf]
  %v106 = vld [vmem:[%s93 + $0x30] sm:$0xf]
  %v107 = vld [vmem:[%s93 + $0x34] sm:$0xf]
  %v108 = vld [vmem:[%s93 + $0x38] sm:$0xf]
  %v109 = vld [vmem:[%s93 + $0x3c] sm:$0xf]
  %v110 = vld [vmem:[%s93 + $0x40] sm:$0xf]
  %v111 = vld [vmem:[%s93 + $0x44] sm:$0xf]
  %v112 = vld [vmem:[%s93 + $0x48] sm:$0xf]
  %v113 = vld [vmem:[%s93 + $0x4c] sm:$0xf]
  %v114 = vld [vmem:[%s93 + $0x50] sm:$0xf]
  %v115 = vld [vmem:[%s93 + $0x54] sm:$0xf]
  %v116 = vld [vmem:[%s93 + $0x58] sm:$0xf]
  %v117 = vld [vmem:[%s93 + $0x5c] sm:$0xf]
  %v118 = vld [vmem:[%s93 + $0x60] sm:$0xf]
  %v119 = vld [vmem:[%s93 + $0x64] sm:$0xf]
  %v120 = vld [vmem:[%s93 + $0x68] sm:$0xf]
  %v121 = vld [vmem:[%s93 + $0x6c] sm:$0xf]
  %v122 = vld [vmem:[%s93 + $0x70] sm:$0xf]
  %v123 = vld [vmem:[%s93 + $0x74] sm:$0xf]
  %v124 = vld [vmem:[%s93 + $0x78] sm:$0xf]
  %v125 = vld [vmem:[%s93 + $0x7c] sm:$0xf]
  %v126 = vld [vmem:[#allocation2] sm:$0xff]
  %v127 = vld [vmem:[#allocation2 + $0x8] sm:$0xff]
  %v128 = vld [vmem:[#allocation2 + $0x10] sm:$0xff]
  %v129 = vld [vmem:[#allocation2 + $0x18] sm:$0xff]
  %v130 = vld [vmem:[#allocation2 + $0x20] sm:$0xff]
  %v131 = vld [vmem:[#allocation2 + $0x28] sm:$0xff]
  %v132 = vld [vmem:[#allocation2 + $0x30] sm:$0xff]
  %v133 = vld [vmem:[#allocation2 + $0x38] sm:$0xff]
  %v134 = vld [vmem:[#allocation2 + $0x40] sm:$0xff]
  %v135 = vld [vmem:[#allocation2 + $0x48] sm:$0xff]
  %v136 = vld [vmem:[#allocation2 + $0x50] sm:$0xff]
  %v137 = vld [vmem:[#allocation2 + $0x58] sm:$0xff]
  %v138 = vld [vmem:[#allocation2 + $0x60] sm:$0xff]
  %v139 = vld [vmem:[#allocation2 + $0x68] sm:$0xff]
  %v140 = vld [vmem:[#allocation2 + $0x70] sm:$0xff]
  %v141 = vld [vmem:[#allocation2 + $0x78] sm:$0xff]
  %v142 = vld [vmem:[%s0] sm:$0xff]
  %v143 = vld [vmem:[%s0 + $0x8] sm:$0xff]
  %v144 = vld [vmem:[%s0 + $0x10] sm:$0xff]
  %v145 = vld [vmem:[%s0 + $0x18] sm:$0xff]
  %v146 = vld [vmem:[%s0 + $0x20] sm:$0xff]
  %v147 = vld [vmem:[%s0 + $0x28] sm:$0xff]
  %v148 = vld [vmem:[%s0 + $0x30] sm:$0xff]
  %v149 = vld [vmem:[%s0 + $0x38] sm:$0xff]
  %v150 = vld [vmem:[%s0 + $0x40] sm:$0xff]
  %v151 = vld [vmem:[%s0 + $0x48] sm:$0xff]
  %v152 = vld [vmem:[%s0 + $0x50] sm:$0xff]
  %v153 = vld [vmem:[%s0 + $0x58] sm:$0xff]
  %v154 = vld [vmem:[%s0 + $0x60] sm:$0xff]
  %v155 = vld [vmem:[%s0 + $0x68] sm:$0xff]
  %v156 = vld [vmem:[%s0 + $0x70] sm:$0xff]
  %v157 = vld [vmem:[%s0 + $0x78] sm:$0xff]
  %v174 = vunpack.c.l.b16 %v142
  %v175 = vunpack.c.h.b16 %v142
  %v176 = vunpack.c.l.b16 %v143
  %v177 = vunpack.c.h.b16 %v143
  %v178 = vunpack.c.l.b16 %v144
  %v179 = vunpack.c.h.b16 %v144
  %v180 = vunpack.c.l.b16 %v145
  %v181 = vunpack.c.h.b16 %v145
  %v182 = vunpack.c.l.b16 %v146
  %v183 = vunpack.c.h.b16 %v146
  %v184 = vunpack.c.l.b16 %v147
  %v185 = vunpack.c.h.b16 %v147
  %v186 = vunpack.c.l.b16 %v148
  %v187 = vunpack.c.h.b16 %v148
  %v188 = vunpack.c.l.b16 %v149
  %v189 = vunpack.c.h.b16 %v149
  %v190 = vunpack.c.l.b16 %v150
  %v191 = vunpack.c.h.b16 %v150
  %v192 = vunpack.c.l.b16 %v151
  %v193 = vunpack.c.h.b16 %v151
  %v194 = vunpack.c.l.b16 %v152
  %v195 = vunpack.c.h.b16 %v152
  %v196 = vunpack.c.l.b16 %v153
  %v197 = vunpack.c.h.b16 %v153
  %v198 = vunpack.c.l.b16 %v154
  %v199 = vunpack.c.h.b16 %v154
  %v200 = vunpack.c.l.b16 %v155
  %v201 = vunpack.c.h.b16 %v155
  %v202 = vunpack.c.l.b16 %v156
  %v203 = vunpack.c.h.b16 %v156
  %v204 = vunpack.c.l.b16 %v157
  %v205 = vunpack.c.h.b16 %v157
  %v206 = vpack.c.b16 %v176, %v174
  %v207 = vpack.c.b16 %v177, %v175
  %v208 = vpack.c.b16 %v180, %v178
  %v209 = vpack.c.b16 %v181, %v179
  %v210 = vpack.c.b16 %v184, %v182
  %v211 = vpack.c.b16 %v185, %v183
  %v212 = vpack.c.b16 %v188, %v186
  %v213 = vpack.c.b16 %v189, %v187
  %v214 = vpack.c.b16 %v192, %v190
  %v215 = vpack.c.b16 %v193, %v191
  %v216 = vpack.c.b16 %v196, %v194
  %v217 = vpack.c.b16 %v197, %v195
  %v218 = vpack.c.b16 %v200, %v198
  %v219 = vpack.c.b16 %v201, %v199
  %v220 = vpack.c.b16 %v204, %v202
  %v221 = vpack.c.b16 %v205, %v203
  %v270 = vunpack.c.l.b16 %v94
  %v271 = vunpack.c.l.b16 %v95
  %v272 = vunpack.c.l.b16 %v96
  %v273 = vunpack.c.l.b16 %v97
  %v274 = vunpack.c.l.b16 %v98
  %v275 = vunpack.c.l.b16 %v99
  %v276 = vunpack.c.l.b16 %v100
  %v277 = vunpack.c.l.b16 %v101
  %v278 = vunpack.c.l.b16 %v102
  %v279 = vunpack.c.l.b16 %v103
  %v280 = vunpack.c.l.b16 %v104
  %v281 = vunpack.c.l.b16 %v105
  %v282 = vunpack.c.l.b16 %v106
  %v283 = vunpack.c.l.b16 %v107
  %v284 = vunpack.c.l.b16 %v108
  %v285 = vunpack.c.l.b16 %v109
  %v286 = vunpack.c.l.b16 %v110
  %v287 = vunpack.c.l.b16 %v111
  %v288 = vunpack.c.l.b16 %v112
  %v289 = vunpack.c.l.b16 %v113
  %v290 = vunpack.c.l.b16 %v114
  %v291 = vunpack.c.l.b16 %v115
  %v292 = vunpack.c.l.b16 %v116
  %v293 = vunpack.c.l.b16 %v117
  %v294 = vunpack.c.l.b16 %v118
  %v295 = vunpack.c.l.b16 %v119
  %v296 = vunpack.c.l.b16 %v120
  %v297 = vunpack.c.l.b16 %v121
  %v298 = vunpack.c.l.b16 %v122
  %v299 = vunpack.c.l.b16 %v123
  %v300 = vunpack.c.l.b16 %v124
  %v301 = vunpack.c.l.b16 %v125
  %v302 = vpack.c.b16 %v271, %v270
  %v303 = vpack.c.b16 %v273, %v272
  %v304 = vpack.c.b16 %v275, %v274
  %v305 = vpack.c.b16 %v277, %v276
  %v306 = vpack.c.b16 %v279, %v278
  %v307 = vpack.c.b16 %v281, %v280
  %v308 = vpack.c.b16 %v283, %v282
  %v309 = vpack.c.b16 %v285, %v284
  %v310 = vpack.c.b16 %v287, %v286
  %v311 = vpack.c.b16 %v289, %v288
  %v312 = vpack.c.b16 %v291, %v290
  %v313 = vpack.c.b16 %v293, %v292
  %v314 = vpack.c.b16 %v295, %v294
  %v315 = vpack.c.b16 %v297, %v296
  %v316 = vpack.c.b16 %v299, %v298
  %v317 = vpack.c.b16 %v301, %v300
  %334 = vmatprep.subr.bf16.mxu0 0
  %335 = vmatpush1.bf16.msra.mxu0 %v309
  %336 = vmatprep.subr.bf16.mxu0 0
  %337 = vmatpush1.bf16.msra.mxu0 %v308
  %338 = vmatprep.subr.bf16.mxu0 0
  %339 = vmatpush1.bf16.msra.mxu0 %v307
  %340 = vmatprep.subr.bf16.mxu0 0
  %341 = vmatpush1.bf16.msra.mxu0 %v306
  %342 = vmatprep.subr.bf16.mxu0 0
  %343 = vmatpush1.bf16.msra.mxu0 %v305
  %344 = vmatprep.subr.bf16.mxu0 0
  %345 = vmatpush1.bf16.msra.mxu0 %v304
  %346 = vmatprep.subr.bf16.mxu0 0
  %347 = vmatpush1.bf16.msra.mxu0 %v303
  %348 = vmatprep.subr.bf16.mxu0 0
  %349 = vmatpush1.bf16.msra.mxu0 %v302
  %350 = vmatprep.subr.bf16.mxu0 0
  %351 = vmatpush2.bf16.msra.mxu0 %v317
  %352 = vmatprep.subr.bf16.mxu0 0
  %353 = vmatpush2.bf16.msra.mxu0 %v316
  %354 = vmatprep.subr.bf16.mxu0 0
  %355 = vmatpush2.bf16.msra.mxu0 %v315
  %356 = vmatprep.subr.bf16.mxu0 0
  %357 = vmatpush2.bf16.msra.mxu0 %v314
  %358 = vmatprep.subr.bf16.mxu0 0
  %359 = vmatpush2.bf16.msra.mxu0 %v313
  %360 = vmatprep.subr.bf16.mxu0 0
  %361 = vmatpush2.bf16.msra.mxu0 %v312
  %362 = vmatprep.subr.bf16.mxu0 0
  %363 = vmatpush2.bf16.msra.mxu0 %v311
  %364 = vmatprep.subr.bf16.mxu0 0
  %365 = vmatpush2.bf16.msra.mxu0 %v310
  %366 = vmatprep.mubr.bf16.mxu0 %v207
  %367 = vmatmul.mubr.bf16.gmra.mxu0 %v206
  %v368 = vpop.f32.mrf.mxu0
  %v369 = vadd.f32 0.0, %v368
  %v370 = vpop.f32.mrf.mxu0
  %v371 = vpop.f32.mrf.mxu0
  %v372 = vadd.f32 0.0, %v371
  %v373 = vpop.f32.mrf.mxu0
  %374 = vmatprep.mubr.bf16.mxu0 %v209
  %375 = vmatmul.mubr.bf16.gmra.mxu0 %v208
  %v376 = vpop.f32.mrf.mxu0
  %v377 = vadd.f32 0.0, %v376
  %v378 = vpop.f32.mrf.mxu0
  %v379 = vpop.f32.mrf.mxu0
  %v380 = vadd.f32 0.0, %v379
  %v381 = vpop.f32.mrf.mxu0
  %382 = vmatprep.mubr.bf16.mxu0 %v211
  %383 = vmatmul.mubr.bf16.gmra.mxu0 %v210
  %v384 = vpop.f32.mrf.mxu0
  %v385 = vadd.f32 0.0, %v384
  %v386 = vpop.f32.mrf.mxu0
  %v387 = vpop.f32.mrf.mxu0
  %v388 = vadd.f32 0.0, %v387
  %v389 = vpop.f32.mrf.mxu0
  %390 = vmatprep.mubr.bf16.mxu0 %v213
  %391 = vmatmul.mubr.bf16.gmra.mxu0 %v212
  %v392 = vpop.f32.mrf.mxu0
  %v393 = vadd.f32 0.0, %v392
  %v394 = vpop.f32.mrf.mxu0
  %v395 = vpop.f32.mrf.mxu0
  %v396 = vadd.f32 0.0, %v395
  %v397 = vpop.f32.mrf.mxu0
  %398 = vmatprep.mubr.bf16.mxu0 %v215
  %399 = vmatmul.mubr.bf16.gmra.mxu0 %v214
  %v400 = vpop.f32.mrf.mxu0
  %v401 = vadd.f32 0.0, %v400
  %v402 = vpop.f32.mrf.mxu0
  %v403 = vpop.f32.mrf.mxu0
  %v404 = vadd.f32 0.0, %v403
  %v405 = vpop.f32.mrf.mxu0
  %406 = vmatprep.mubr.bf16.mxu0 %v217
  %407 = vmatmul.mubr.bf16.gmra.mxu0 %v216
  %v408 = vpop.f32.mrf.mxu0
  %v409 = vadd.f32 0.0, %v408
  %v410 = vpop.f32.mrf.mxu0
  %v411 = vpop.f32.mrf.mxu0
  %v412 = vadd.f32 0.0, %v411
  %v413 = vpop.f32.mrf.mxu0
  %414 = vmatprep.mubr.bf16.mxu0 %v219
  %415 = vmatmul.mubr.bf16.gmra.mxu0 %v218
  %v416 = vpop.f32.mrf.mxu0
  %v417 = vadd.f32 0.0, %v416
  %v418 = vpop.f32.mrf.mxu0
  %v419 = vpop.f32.mrf.mxu0
  %v420 = vadd.f32 0.0, %v419
  %v421 = vpop.f32.mrf.mxu0
  %422 = vmatprep.mubr.bf16.mxu0 %v221
  %423 = vmatmul.mubr.bf16.gmra.mxu0 %v220
  %v424 = vpop.f32.mrf.mxu0
  %v425 = vadd.f32 0.0, %v424
  %v426 = vpop.f32.mrf.mxu0
  %v427 = vpop.f32.mrf.mxu0
  %v428 = vadd.f32 0.0, %v427
  %v429 = vpop.f32.mrf.mxu0
  %430 = vdwg.mxu0
  %v431 = vadd.f32 %v126, %v369
  %v432 = vadd.f32 %v127, %v372
  %v433 = vadd.f32 %v128, %v377
  %v434 = vadd.f32 %v129, %v380
  %v435 = vadd.f32 %v130, %v385
  %v436 = vadd.f32 %v131, %v388
  %v437 = vadd.f32 %v132, %v393
  %v438 = vadd.f32 %v133, %v396
  %v439 = vadd.f32 %v134, %v401
  %v440 = vadd.f32 %v135, %v404
  %v441 = vadd.f32 %v136, %v409
  %v442 = vadd.f32 %v137, %v412
  %v443 = vadd.f32 %v138, %v417
  %v444 = vadd.f32 %v139, %v420
  %v445 = vadd.f32 %v140, %v425
  %v446 = vadd.f32 %v141, %v428
  %447 = vst [vmem:[#allocation2] sm:$0xff] %v431
  %448 = vst [vmem:[#allocation2 + $0x8] sm:$0xff] %v432
  %449 = vst [vmem:[#allocation2 + $0x10] sm:$0xff] %v433
  %450 = vst [vmem:[#allocation2 + $0x18] sm:$0xff] %v434
  %451 = vst [vmem:[#allocation2 + $0x20] sm:$0xff] %v435
  %452 = vst [vmem:[#allocation2 + $0x28] sm:$0xff] %v436
  %453 = vst [vmem:[#allocation2 + $0x30] sm:$0xff] %v437
  %454 = vst [vmem:[#allocation2 + $0x38] sm:$0xff] %v438
  %455 = vst [vmem:[#allocation2 + $0x40] sm:$0xff] %v439
  %456 = vst [vmem:[#allocation2 + $0x48] sm:$0xff] %v440
  %457 = vst [vmem:[#allocation2 + $0x50] sm:$0xff] %v441
  %458 = vst [vmem:[#allocation2 + $0x58] sm:$0xff] %v442
  %459 = vst [vmem:[#allocation2 + $0x60] sm:$0xff] %v443
  %460 = vst [vmem:[#allocation2 + $0x68] sm:$0xff] %v444
  %461 = vst [vmem:[#allocation2 + $0x70] sm:$0xff] %v445
  %462 = vst [vmem:[#allocation2 + $0x78] sm:$0xff] %v446
  // Predicated region
  $region18: #{rgcn_forward.5} parent=0 // pred_check
    %p463 = pneg %p37
  $region19: #{rgcn_forward.5} parent=0 // pred_check_branch
    %465 = sbr.rel (%p463) target = $region21
  $region20: #{rgcn_forward.5} parent=0 // pred_region
    %v466 = vld [vmem:[#allocation2] sm:$0xff]
    %v467 = vld [vmem:[#allocation2 + $0x8] sm:$0xff]
    %v468 = vld [vmem:[#allocation2 + $0x10] sm:$0xff]
    %v469 = vld [vmem:[#allocation2 + $0x18] sm:$0xff]
    %v470 = vld [vmem:[#allocation2 + $0x20] sm:$0xff]
    %v471 = vld [vmem:[#allocation2 + $0x28] sm:$0xff]
    %v472 = vld [vmem:[#allocation2 + $0x30] sm:$0xff]
    %v473 = vld [vmem:[#allocation2 + $0x38] sm:$0xff]
    %v474 = vld [vmem:[#allocation2 + $0x40] sm:$0xff]
    %v475 = vld [vmem:[#allocation2 + $0x48] sm:$0xff]
    %v476 = vld [vmem:[#allocation2 + $0x50] sm:$0xff]
    %v477 = vld [vmem:[#allocation2 + $0x58] sm:$0xff]
    %v478 = vld [vmem:[#allocation2 + $0x60] sm:$0xff]
    %v479 = vld [vmem:[#allocation2 + $0x68] sm:$0xff]
    %v480 = vld [vmem:[#allocation2 + $0x70] sm:$0xff]
    %v481 = vld [vmem:[#allocation2 + $0x78] sm:$0xff]
    %v482 = vmax.f32 %v466, 0.0
    %v483 = vmax.f32 %v467, 0.0
    %v484 = vmax.f32 %v468, 0.0
    %v485 = vmax.f32 %v469, 0.0
    %v486 = vmax.f32 %v470, 0.0
    %v487 = vmax.f32 %v471, 0.0
    %v488 = vmax.f32 %v472, 0.0
    %v489 = vmax.f32 %v473, 0.0
    %v490 = vmax.f32 %v474, 0.0
    %v491 = vmax.f32 %v475, 0.0
    %v492 = vmax.f32 %v476, 0.0
    %v493 = vmax.f32 %v477, 0.0
    %v494 = vmax.f32 %v478, 0.0
    %v495 = vmax.f32 %v479, 0.0
    %v496 = vmax.f32 %v480, 0.0
    %v497 = vmax.f32 %v481, 0.0
    %v498 = vlaneseq
    %v499 = vand.u32 %v498, 127
    %vm500 = vcmp.eq.s32.totalorder %v499, 32
    %v501 = vsel %vm500, 1.0, %v482
    %v502 = vsel %vm500, 1.0, %v483
    %v503 = vsel %vm500, 1.0, %v484
    %v504 = vsel %vm500, 1.0, %v485
    %v505 = vsel %vm500, 1.0, %v486
    %v506 = vsel %vm500, 1.0, %v487
    %v507 = vsel %vm500, 1.0, %v488
    %v508 = vsel %vm500, 1.0, %v489
    %v509 = vsel %vm500, 1.0, %v490
    %v510 = vsel %vm500, 1.0, %v491
    %v511 = vsel %vm500, 1.0, %v492
    %v512 = vsel %vm500, 1.0, %v493
    %v513 = vsel %vm500, 1.0, %v494
    %v514 = vsel %vm500, 1.0, %v495
    %v515 = vsel %vm500, 1.0, %v496
    %v516 = vsel %vm500, 1.0, %v497
    %v517 = vpack.c.bf16 %v502, %v501
    %v518 = vpack.c.bf16 %v504, %v503
    %v519 = vpack.c.bf16 %v506, %v505
    %v520 = vpack.c.bf16 %v508, %v507
    %v521 = vpack.c.bf16 %v510, %v509
    %v522 = vpack.c.bf16 %v512, %v511
    %v523 = vpack.c.bf16 %v514, %v513
    %v524 = vpack.c.bf16 %v516, %v515
    %v533 = vunpack.c.l.b16 %v517
    %v534 = vunpack.c.h.b16 %v517
    %v535 = vunpack.c.l.b16 %v518
    %v536 = vunpack.c.h.b16 %v518
    %v537 = vunpack.c.l.b16 %v519
    %v538 = vunpack.c.h.b16 %v519
    %v539 = vunpack.c.l.b16 %v520
    %v540 = vunpack.c.h.b16 %v520
    %v541 = vunpack.c.l.b16 %v521
    %v542 = vunpack.c.h.b16 %v521
    %v543 = vunpack.c.l.b16 %v522
    %v544 = vunpack.c.h.b16 %v522
    %v545 = vunpack.c.l.b16 %v523
    %v546 = vunpack.c.h.b16 %v523
    %v547 = vunpack.c.l.b16 %v524
    %v548 = vunpack.c.h.b16 %v524
    %v549 = vpack.c.b16 %v533, %v533
    %v550 = vpack.c.b16 %v534, %v534
    %v551 = vpack.c.b16 %v535, %v535
    %v552 = vpack.c.b16 %v536, %v536
    %v553 = vpack.c.b16 %v537, %v537
    %v554 = vpack.c.b16 %v538, %v538
    %v555 = vpack.c.b16 %v539, %v539
    %v556 = vpack.c.b16 %v540, %v540
    %v557 = vpack.c.b16 %v541, %v541
    %v558 = vpack.c.b16 %v542, %v542
    %v559 = vpack.c.b16 %v543, %v543
    %v560 = vpack.c.b16 %v544, %v544
    %v561 = vpack.c.b16 %v545, %v545
    %v562 = vpack.c.b16 %v546, %v546
    %v563 = vpack.c.b16 %v547, %v547
    %v564 = vpack.c.b16 %v548, %v548
    %581 = vst [vmem:[%s3] sm:$0xf] %v549
    %582 = vst [vmem:[%s3 + $0x4] sm:$0xf] %v550
    %583 = vst [vmem:[%s3 + $0x8] sm:$0xf] %v551
    %584 = vst [vmem:[%s3 + $0xc] sm:$0xf] %v552
    %585 = vst [vmem:[%s3 + $0x10] sm:$0xf] %v553
    %586 = vst [vmem:[%s3 + $0x14] sm:$0xf] %v554
    %587 = vst [vmem:[%s3 + $0x18] sm:$0xf] %v555
    %588 = vst [vmem:[%s3 + $0x1c] sm:$0xf] %v556
    %589 = vst [vmem:[%s3 + $0x20] sm:$0xf] %v557
    %590 = vst [vmem:[%s3 + $0x24] sm:$0xf] %v558
    %591 = vst [vmem:[%s3 + $0x28] sm:$0xf] %v559
    %592 = vst [vmem:[%s3 + $0x2c] sm:$0xf] %v560
    %593 = vst [vmem:[%s3 + $0x30] sm:$0xf] %v561
    %594 = vst [vmem:[%s3 + $0x34] sm:$0xf] %v562
    %595 = vst [vmem:[%s3 + $0x38] sm:$0xf] %v563
    %596 = vst [vmem:[%s3 + $0x3c] sm:$0xf] %v564
  $region21: #{rgcn_forward.5} parent=0 // pred_fallthru
    _
  // Predicated region
  $region22: #{rgcn_forward.5} parent=0 // pred_check
    _
  $region23: #{rgcn_forward.5} parent=0 // pred_check_branch
    %598 = sbr.rel (0) target = $region25
  $region24: #{rgcn_forward.5} parent=0 // pred_region
    _
  $region25: #{rgcn_forward.5} parent=0 // pred_fallthru
    _
  // Predicated region
  $region26: #{rgcn_forward.5} parent=0 // pred_check
    _
  $region27: #{rgcn_forward.5} parent=0 // pred_check_branch
    %600 = sbr.rel (0) target = $region29
  $region28: #{rgcn_forward.5} parent=0 // pred_region
    _
  $region29: #{rgcn_forward.5} parent=0 // pred_fallthru
    _

// kernel: rgcn_forward.7
$region0: #{rgcn_forward.7}
  #allocation0 [shape = 'u32[]', space=smem, size = 0x4, offset = 0x4, fixed_abs, tag = 'smem constant byte address 0x4 - core index']
  #allocation1 [shape = 'u32[144,128]{1,0:T(1,128)}', space=vmem, size = 0x12000, scoped, tag = 'internal scratch']
  #allocation2 [shape = 'f32[128,128]{1,0:T(8,128)}', space=vmem, size = 0x10000, scoped, tag = 'scratch operand']
  %s0 = inlined_call_operand.vmem [shape: bf16[128,256], index: 0, kind: input, shape index: {}]
  %s1 = inlined_call_operand.vmem [shape: bf16[384,128], index: 1, kind: input, shape index: {}, may-alias: {1,2}]
  %s2 = inlined_call_operand.vmem [shape: bf16[384,128], index: 2, kind: input, shape index: {}, may-alias: {1,2}]
  %s3 = inlined_call_operand.vmem [shape: f32[128,128], index: 3, kind: output, shape index: {}]
  %s4 = sld [smem:[#allocation0]]
  $region30: #{rgcn_forward.7} parent=0
    _
  %s6 = ssub.s32 1, %s4
  %s7 = scalar_select 0, %s6, %s4
  // Predicated region
  $region2: #{rgcn_forward.7} parent=0 // pred_check
    _
  $region3: #{rgcn_forward.7} parent=0 // pred_check_branch
    %9 = sbr.rel (0) target = $region5
  $region4: #{rgcn_forward.7} parent=0 // pred_region
    _
  $region5: #{rgcn_forward.7} parent=0 // pred_fallthru
    _
  // Predicated region
  $region6: #{rgcn_forward.7} parent=0 // pred_check
    _
  $region7: #{rgcn_forward.7} parent=0 // pred_check_branch
    %11 = sbr.rel (0) target = $region9
  $region8: #{rgcn_forward.7} parent=0 // pred_region
    _
  $region9: #{rgcn_forward.7} parent=0 // pred_fallthru
    _
  // Predicated region
  $region10: #{rgcn_forward.7} parent=0 // pred_check
    _
  $region11: #{rgcn_forward.7} parent=0 // pred_check_branch
    %13 = sbr.rel (0) target = $region13
  $region12: #{rgcn_forward.7} parent=0 // pred_region
    %s14 = sadd.s32 0, 2
    %s15 = smul.u32 16, %s14
    %p16 = scmp.lt.s32.totalorder %s15, 47
    %s17 = scalar_select %p16, %s15, 47
    %s18 = smul.addr %s17, 4
    %s19 = scalar_lea.vmem %s2, %s18
    %s20 = sadd.s32 0, 2
    %s21 = smul.u32 16, %s20
  $region13: #{rgcn_forward.7} parent=0 // pred_fallthru
    _
  %s22 = sadd.s32 0, 2
  %s23 = smul.u32 16, %s22
  %p24 = scmp.lt.s32.totalorder %s23, 47
  %s25 = scalar_select %p24, %s23, 47
  %s26 = smul.addr %s25, 4
  %s27 = scalar_lea.vmem %s2, %s26
  %s28 = sadd.s32 0, 2
  %s29 = smul.u32 16, %s28
  %p30 = scmp.lt.s32.totalorder %s29, 47
  %s31 = scalar_select %p30, %s29, 47
  %s32 = smul.addr %s31, 4
  %s33 = scalar_lea.vmem %s2, %s32
  %s34 = sadd.s32 0, 2
  %s35 = smul.u32 16, %s34
  %p37 = scmp.eq.s32.totalorder 0, 0
  // Predicated region
  $region14: #{rgcn_forward.7} parent=0 // pred_check
    %p38 = pneg %p37
  $region15: #{rgcn_forward.7} parent=0 // pred_check_branch
    %40 = sbr.rel (%p38) target = $region17
  $region16: #{rgcn_forward.7} parent=0 // pred_region
    %v41 = vld [vmem:[%s33] sm:$0xf]
    %v42 = vld [vmem:[%s33 + $0x4] sm:$0xf]
    %v43 = vld [vmem:[%s33 + $0x8] sm:$0xf]
    %v44 = vld [vmem:[%s33 + $0xc] sm:$0xf]
    %v45 = vld [vmem:[%s33 + $0x10] sm:$0xf]
    %v46 = vld [vmem:[%s33 + $0x14] sm:$0xf]
    %v47 = vld [vmem:[%s33 + $0x18] sm:$0xf]
    %v48 = vld [vmem:[%s33 + $0x1c] sm:$0xf]
    %v49 = vld [vmem:[%s33 + $0x20] sm:$0xf]
    %v50 = vld [vmem:[%s33 + $0x24] sm:$0xf]
    %v51 = vld [vmem:[%s33 + $0x28] sm:$0xf]
    %v52 = vld [vmem:[%s33 + $0x2c] sm:$0xf]
    %v53 = vld [vmem:[%s33 + $0x30] sm:$0xf]
    %v54 = vld [vmem:[%s33 + $0x34] sm:$0xf]
    %v55 = vld [vmem:[%s33 + $0x38] sm:$0xf]
    %v56 = vld [vmem:[%s33 + $0x3c] sm:$0xf]
    %v57 = vunpack.c.l.bf16 %v41
    %v58 = vunpack.c.l.bf16 %v42
    %v59 = vunpack.c.l.bf16 %v43
    %v60 = vunpack.c.l.bf16 %v44
    %v61 = vunpack.c.l.bf16 %v45
    %v62 = vunpack.c.l.bf16 %v46
    %v63 = vunpack.c.l.bf16 %v47
    %v64 = vunpack.c.l.bf16 %v48
    %v65 = vunpack.c.l.bf16 %v49
    %v66 = vunpack.c.l.bf16 %v50
    %v67 = vunpack.c.l.bf16 %v51
    %v68 = vunpack.c.l.bf16 %v52
    %v69 = vunpack.c.l.bf16 %v53
    %v70 = vunpack.c.l.bf16 %v54
    %v71 = vunpack.c.l.bf16 %v55
    %v72 = vunpack.c.l.bf16 %v56
    %73 = vst [vmem:[#allocation2] sm:$0xff] %v57
    %74 = vst [vmem:[#allocation2 + $0x8] sm:$0xff] %v58
    %75 = vst [vmem:[#allocation2 + $0x10] sm:$0xff] %v59
    %76 = vst [vmem:[#allocation2 + $0x18] sm:$0xff] %v60
    %77 = vst [vmem:[#allocation2 + $0x20] sm:$0xff] %v61
    %78 = vst [vmem:[#allocation2 + $0x28] sm:$0xff] %v62
    %79 = vst [vmem:[#allocation2 + $0x30] sm:$0xff] %v63
    %80 = vst [vmem:[#allocation2 + $0x38] sm:$0xff] %v64
    %81 = vst [vmem:[#allocation2 + $0x40] sm:$0xff] %v65
    %82 = vst [vmem:[#allocation2 + $0x48] sm:$0xff] %v66
    %83 = vst [vmem:[#allocation2 + $0x50] sm:$0xff] %v67
    %84 = vst [vmem:[#allocation2 + $0x58] sm:$0xff] %v68
    %85 = vst [vmem:[#allocation2 + $0x60] sm:$0xff] %v69
    %86 = vst [vmem:[#allocation2 + $0x68] sm:$0xff] %v70
    %87 = vst [vmem:[#allocation2 + $0x70] sm:$0xff] %v71
    %88 = vst [vmem:[#allocation2 + $0x78] sm:$0xff] %v72
  $region17: #{rgcn_forward.7} parent=0 // pred_fallthru
    _
  %s89 = smul.u32 0, 256
  %s90 = sshra.s32 %s89, 3
  %s91 = sand.u32 %s89, 7
  %s92 = smul.addr %s90, 4
  %s93 = scalar_lea.vmem %s1, %s92
  %v94 = vld [vmem:[%s93] sm:$0xf]
  %v95 = vld [vmem:[%s93 + $0x4] sm:$0xf]
  %v96 = vld [vmem:[%s93 + $0x8] sm:$0xf]
  %v97 = vld [vmem:[%s93 + $0xc] sm:$0xf]
  %v98 = vld [vmem:[%s93 + $0x10] sm:$0xf]
  %v99 = vld [vmem:[%s93 + $0x14] sm:$0xf]
  %v100 = vld [vmem:[%s93 + $0x18] sm:$0xf]
  %v101 = vld [vmem:[%s93 + $0x1c] sm:$0xf]
  %v102 = vld [vmem:[%s93 + $0x20] sm:$0xf]
  %v103 = vld [vmem:[%s93 + $0x24] sm:$0xf]
  %v104 = vld [vmem:[%s93 + $0x28] sm:$0xf]
  %v105 = vld [vmem:[%s93 + $0x2c] sm:$0xf]
  %v106 = vld [vmem:[%s93 + $0x30] sm:$0xf]
  %v107 = vld [vmem:[%s93 + $0x34] sm:$0xf]
  %v108 = vld [vmem:[%s93 + $0x38] sm:$0xf]
  %v109 = vld [vmem:[%s93 + $0x3c] sm:$0xf]
  %v110 = vld [vmem:[%s93 + $0x40] sm:$0xf]
  %v111 = vld [vmem:[%s93 + $0x44] sm:$0xf]
  %v112 = vld [vmem:[%s93 + $0x48] sm:$0xf]
  %v113 = vld [vmem:[%s93 + $0x4c] sm:$0xf]
  %v114 = vld [vmem:[%s93 + $0x50] sm:$0xf]
  %v115 = vld [vmem:[%s93 + $0x54] sm:$0xf]
  %v116 = vld [vmem:[%s93 + $0x58] sm:$0xf]
  %v117 = vld [vmem:[%s93 + $0x5c] sm:$0xf]
  %v118 = vld [vmem:[%s93 + $0x60] sm:$0xf]
  %v119 = vld [vmem:[%s93 + $0x64] sm:$0xf]
  %v120 = vld [vmem:[%s93 + $0x68] sm:$0xf]
  %v121 = vld [vmem:[%s93 + $0x6c] sm:$0xf]
  %v122 = vld [vmem:[%s93 + $0x70] sm:$0xf]
  %v123 = vld [vmem:[%s93 + $0x74] sm:$0xf]
  %v124 = vld [vmem:[%s93 + $0x78] sm:$0xf]
  %v125 = vld [vmem:[%s93 + $0x7c] sm:$0xf]
  %v126 = vld [vmem:[#allocation2] sm:$0xff]
  %v127 = vld [vmem:[#allocation2 + $0x8] sm:$0xff]
  %v128 = vld [vmem:[#allocation2 + $0x10] sm:$0xff]
  %v129 = vld [vmem:[#allocation2 + $0x18] sm:$0xff]
  %v130 = vld [vmem:[#allocation2 + $0x20] sm:$0xff]
  %v131 = vld [vmem:[#allocation2 + $0x28] sm:$0xff]
  %v132 = vld [vmem:[#allocation2 + $0x30] sm:$0xff]
  %v133 = vld [vmem:[#allocation2 + $0x38] sm:$0xff]
  %v134 = vld [vmem:[#allocation2 + $0x40] sm:$0xff]
  %v135 = vld [vmem:[#allocation2 + $0x48] sm:$0xff]
  %v136 = vld [vmem:[#allocation2 + $0x50] sm:$0xff]
  %v137 = vld [vmem:[#allocation2 + $0x58] sm:$0xff]
  %v138 = vld [vmem:[#allocation2 + $0x60] sm:$0xff]
  %v139 = vld [vmem:[#allocation2 + $0x68] sm:$0xff]
  %v140 = vld [vmem:[#allocation2 + $0x70] sm:$0xff]
  %v141 = vld [vmem:[#allocation2 + $0x78] sm:$0xff]
  %v142 = vld [vmem:[%s0] sm:$0xff]
  %v143 = vld [vmem:[%s0 + $0x8] sm:$0xff]
  %v144 = vld [vmem:[%s0 + $0x10] sm:$0xff]
  %v145 = vld [vmem:[%s0 + $0x18] sm:$0xff]
  %v146 = vld [vmem:[%s0 + $0x20] sm:$0xff]
  %v147 = vld [vmem:[%s0 + $0x28] sm:$0xff]
  %v148 = vld [vmem:[%s0 + $0x30] sm:$0xff]
  %v149 = vld [vmem:[%s0 + $0x38] sm:$0xff]
  %v150 = vld [vmem:[%s0 + $0x40] sm:$0xff]
  %v151 = vld [vmem:[%s0 + $0x48] sm:$0xff]
  %v152 = vld [vmem:[%s0 + $0x50] sm:$0xff]
  %v153 = vld [vmem:[%s0 + $0x58] sm:$0xff]
  %v154 = vld [vmem:[%s0 + $0x60] sm:$0xff]
  %v155 = vld [vmem:[%s0 + $0x68] sm:$0xff]
  %v156 = vld [vmem:[%s0 + $0x70] sm:$0xff]
  %v157 = vld [vmem:[%s0 + $0x78] sm:$0xff]
  %v174 = vunpack.c.l.b16 %v142
  %v175 = vunpack.c.h.b16 %v142
  %v176 = vunpack.c.l.b16 %v143
  %v177 = vunpack.c.h.b16 %v143
  %v178 = vunpack.c.l.b16 %v144
  %v179 = vunpack.c.h.b16 %v144
  %v180 = vunpack.c.l.b16 %v145
  %v181 = vunpack.c.h.b16 %v145
  %v182 = vunpack.c.l.b16 %v146
  %v183 = vunpack.c.h.b16 %v146
  %v184 = vunpack.c.l.b16 %v147
  %v185 = vunpack.c.h.b16 %v147
  %v186 = vunpack.c.l.b16 %v148
  %v187 = vunpack.c.h.b16 %v148
  %v188 = vunpack.c.l.b16 %v149
  %v189 = vunpack.c.h.b16 %v149
  %v190 = vunpack.c.l.b16 %v150
  %v191 = vunpack.c.h.b16 %v150
  %v192 = vunpack.c.l.b16 %v151
  %v193 = vunpack.c.h.b16 %v151
  %v194 = vunpack.c.l.b16 %v152
  %v195 = vunpack.c.h.b16 %v152
  %v196 = vunpack.c.l.b16 %v153
  %v197 = vunpack.c.h.b16 %v153
  %v198 = vunpack.c.l.b16 %v154
  %v199 = vunpack.c.h.b16 %v154
  %v200 = vunpack.c.l.b16 %v155
  %v201 = vunpack.c.h.b16 %v155
  %v202 = vunpack.c.l.b16 %v156
  %v203 = vunpack.c.h.b16 %v156
  %v204 = vunpack.c.l.b16 %v157
  %v205 = vunpack.c.h.b16 %v157
  %v206 = vpack.c.b16 %v176, %v174
  %v207 = vpack.c.b16 %v177, %v175
  %v208 = vpack.c.b16 %v180, %v178
  %v209 = vpack.c.b16 %v181, %v179
  %v210 = vpack.c.b16 %v184, %v182
  %v211 = vpack.c.b16 %v185, %v183
  %v212 = vpack.c.b16 %v188, %v186
  %v213 = vpack.c.b16 %v189, %v187
  %v214 = vpack.c.b16 %v192, %v190
  %v215 = vpack.c.b16 %v193, %v191
  %v216 = vpack.c.b16 %v196, %v194
  %v217 = vpack.c.b16 %v197, %v195
  %v218 = vpack.c.b16 %v200, %v198
  %v219 = vpack.c.b16 %v201, %v199
  %v220 = vpack.c.b16 %v204, %v202
  %v221 = vpack.c.b16 %v205, %v203
  %v270 = vunpack.c.l.b16 %v94
  %v271 = vunpack.c.l.b16 %v95
  %v272 = vunpack.c.l.b16 %v96
  %v273 = vunpack.c.l.b16 %v97
  %v274 = vunpack.c.l.b16 %v98
  %v275 = vunpack.c.l.b16 %v99
  %v276 = vunpack.c.l.b16 %v100
  %v277 = vunpack.c.l.b16 %v101
  %v278 = vunpack.c.l.b16 %v102
  %v279 = vunpack.c.l.b16 %v103
  %v280 = vunpack.c.l.b16 %v104
  %v281 = vunpack.c.l.b16 %v105
  %v282 = vunpack.c.l.b16 %v106
  %v283 = vunpack.c.l.b16 %v107
  %v284 = vunpack.c.l.b16 %v108
  %v285 = vunpack.c.l.b16 %v109
  %v286 = vunpack.c.l.b16 %v110
  %v287 = vunpack.c.l.b16 %v111
  %v288 = vunpack.c.l.b16 %v112
  %v289 = vunpack.c.l.b16 %v113
  %v290 = vunpack.c.l.b16 %v114
  %v291 = vunpack.c.l.b16 %v115
  %v292 = vunpack.c.l.b16 %v116
  %v293 = vunpack.c.l.b16 %v117
  %v294 = vunpack.c.l.b16 %v118
  %v295 = vunpack.c.l.b16 %v119
  %v296 = vunpack.c.l.b16 %v120
  %v297 = vunpack.c.l.b16 %v121
  %v298 = vunpack.c.l.b16 %v122
  %v299 = vunpack.c.l.b16 %v123
  %v300 = vunpack.c.l.b16 %v124
  %v301 = vunpack.c.l.b16 %v125
  %v302 = vpack.c.b16 %v271, %v270
  %v303 = vpack.c.b16 %v273, %v272
  %v304 = vpack.c.b16 %v275, %v274
  %v305 = vpack.c.b16 %v277, %v276
  %v306 = vpack.c.b16 %v279, %v278
  %v307 = vpack.c.b16 %v281, %v280
  %v308 = vpack.c.b16 %v283, %v282
  %v309 = vpack.c.b16 %v285, %v284
  %v310 = vpack.c.b16 %v287, %v286
  %v311 = vpack.c.b16 %v289, %v288
  %v312 = vpack.c.b16 %v291, %v290
  %v313 = vpack.c.b16 %v293, %v292
  %v314 = vpack.c.b16 %v295, %v294
  %v315 = vpack.c.b16 %v297, %v296
  %v316 = vpack.c.b16 %v299, %v298
  %v317 = vpack.c.b16 %v301, %v300
  %334 = vmatprep.subr.bf16.mxu0 0
  %335 = vmatpush1.bf16.msra.mxu0 %v309
  %336 = vmatprep.subr.bf16.mxu0 0
  %337 = vmatpush1.bf16.msra.mxu0 %v308
  %338 = vmatprep.subr.bf16.mxu0 0
  %339 = vmatpush1.bf16.msra.mxu0 %v307
  %340 = vmatprep.subr.bf16.mxu0 0
  %341 = vmatpush1.bf16.msra.mxu0 %v306
  %342 = vmatprep.subr.bf16.mxu0 0
  %343 = vmatpush1.bf16.msra.mxu0 %v305
  %344 = vmatprep.subr.bf16.mxu0 0
  %345 = vmatpush1.bf16.msra.mxu0 %v304
  %346 = vmatprep.subr.bf16.mxu0 0
  %347 = vmatpush1.bf16.msra.mxu0 %v303
  %348 = vmatprep.subr.bf16.mxu0 0
  %349 = vmatpush1.bf16.msra.mxu0 %v302
  %350 = vmatprep.subr.bf16.mxu0 0
  %351 = vmatpush2.bf16.msra.mxu0 %v317
  %352 = vmatprep.subr.bf16.mxu0 0
  %353 = vmatpush2.bf16.msra.mxu0 %v316
  %354 = vmatprep.subr.bf16.mxu0 0
  %355 = vmatpush2.bf16.msra.mxu0 %v315
  %356 = vmatprep.subr.bf16.mxu0 0
  %357 = vmatpush2.bf16.msra.mxu0 %v314
  %358 = vmatprep.subr.bf16.mxu0 0
  %359 = vmatpush2.bf16.msra.mxu0 %v313
  %360 = vmatprep.subr.bf16.mxu0 0
  %361 = vmatpush2.bf16.msra.mxu0 %v312
  %362 = vmatprep.subr.bf16.mxu0 0
  %363 = vmatpush2.bf16.msra.mxu0 %v311
  %364 = vmatprep.subr.bf16.mxu0 0
  %365 = vmatpush2.bf16.msra.mxu0 %v310
  %366 = vmatprep.mubr.bf16.mxu0 %v207
  %367 = vmatmul.mubr.bf16.gmra.mxu0 %v206
  %v368 = vpop.f32.mrf.mxu0
  %v369 = vadd.f32 0.0, %v368
  %v370 = vpop.f32.mrf.mxu0
  %v371 = vpop.f32.mrf.mxu0
  %v372 = vadd.f32 0.0, %v371
  %v373 = vpop.f32.mrf.mxu0
  %374 = vmatprep.mubr.bf16.mxu0 %v209
  %375 = vmatmul.mubr.bf16.gmra.mxu0 %v208
  %v376 = vpop.f32.mrf.mxu0
  %v377 = vadd.f32 0.0, %v376
  %v378 = vpop.f32.mrf.mxu0
  %v379 = vpop.f32.mrf.mxu0
  %v380 = vadd.f32 0.0, %v379
  %v381 = vpop.f32.mrf.mxu0
  %382 = vmatprep.mubr.bf16.mxu0 %v211
  %383 = vmatmul.mubr.bf16.gmra.mxu0 %v210
  %v384 = vpop.f32.mrf.mxu0
  %v385 = vadd.f32 0.0, %v384
  %v386 = vpop.f32.mrf.mxu0
  %v387 = vpop.f32.mrf.mxu0
  %v388 = vadd.f32 0.0, %v387
  %v389 = vpop.f32.mrf.mxu0
  %390 = vmatprep.mubr.bf16.mxu0 %v213
  %391 = vmatmul.mubr.bf16.gmra.mxu0 %v212
  %v392 = vpop.f32.mrf.mxu0
  %v393 = vadd.f32 0.0, %v392
  %v394 = vpop.f32.mrf.mxu0
  %v395 = vpop.f32.mrf.mxu0
  %v396 = vadd.f32 0.0, %v395
  %v397 = vpop.f32.mrf.mxu0
  %398 = vmatprep.mubr.bf16.mxu0 %v215
  %399 = vmatmul.mubr.bf16.gmra.mxu0 %v214
  %v400 = vpop.f32.mrf.mxu0
  %v401 = vadd.f32 0.0, %v400
  %v402 = vpop.f32.mrf.mxu0
  %v403 = vpop.f32.mrf.mxu0
  %v404 = vadd.f32 0.0, %v403
  %v405 = vpop.f32.mrf.mxu0
  %406 = vmatprep.mubr.bf16.mxu0 %v217
  %407 = vmatmul.mubr.bf16.gmra.mxu0 %v216
  %v408 = vpop.f32.mrf.mxu0
  %v409 = vadd.f32 0.0, %v408
  %v410 = vpop.f32.mrf.mxu0
  %v411 = vpop.f32.mrf.mxu0
  %v412 = vadd.f32 0.0, %v411
  %v413 = vpop.f32.mrf.mxu0
  %414 = vmatprep.mubr.bf16.mxu0 %v219
  %415 = vmatmul.mubr.bf16.gmra.mxu0 %v218
  %v416 = vpop.f32.mrf.mxu0
  %v417 = vadd.f32 0.0, %v416
  %v418 = vpop.f32.mrf.mxu0
  %v419 = vpop.f32.mrf.mxu0
  %v420 = vadd.f32 0.0, %v419
  %v421 = vpop.f32.mrf.mxu0
  %422 = vmatprep.mubr.bf16.mxu0 %v221
  %423 = vmatmul.mubr.bf16.gmra.mxu0 %v220
  %v424 = vpop.f32.mrf.mxu0
  %v425 = vadd.f32 0.0, %v424
  %v426 = vpop.f32.mrf.mxu0
  %v427 = vpop.f32.mrf.mxu0
  %v428 = vadd.f32 0.0, %v427
  %v429 = vpop.f32.mrf.mxu0
  %430 = vdwg.mxu0
  %v431 = vadd.f32 %v126, %v369
  %v432 = vadd.f32 %v127, %v372
  %v433 = vadd.f32 %v128, %v377
  %v434 = vadd.f32 %v129, %v380
  %v435 = vadd.f32 %v130, %v385
  %v436 = vadd.f32 %v131, %v388
  %v437 = vadd.f32 %v132, %v393
  %v438 = vadd.f32 %v133, %v396
  %v439 = vadd.f32 %v134, %v401
  %v440 = vadd.f32 %v135, %v404
  %v441 = vadd.f32 %v136, %v409
  %v442 = vadd.f32 %v137, %v412
  %v443 = vadd.f32 %v138, %v417
  %v444 = vadd.f32 %v139, %v420
  %v445 = vadd.f32 %v140, %v425
  %v446 = vadd.f32 %v141, %v428
  %447 = vst [vmem:[#allocation2] sm:$0xff] %v431
  %448 = vst [vmem:[#allocation2 + $0x8] sm:$0xff] %v432
  %449 = vst [vmem:[#allocation2 + $0x10] sm:$0xff] %v433
  %450 = vst [vmem:[#allocation2 + $0x18] sm:$0xff] %v434
  %451 = vst [vmem:[#allocation2 + $0x20] sm:$0xff] %v435
  %452 = vst [vmem:[#allocation2 + $0x28] sm:$0xff] %v436
  %453 = vst [vmem:[#allocation2 + $0x30] sm:$0xff] %v437
  %454 = vst [vmem:[#allocation2 + $0x38] sm:$0xff] %v438
  %455 = vst [vmem:[#allocation2 + $0x40] sm:$0xff] %v439
  %456 = vst [vmem:[#allocation2 + $0x48] sm:$0xff] %v440
  %457 = vst [vmem:[#allocation2 + $0x50] sm:$0xff] %v441
  %458 = vst [vmem:[#allocation2 + $0x58] sm:$0xff] %v442
  %459 = vst [vmem:[#allocation2 + $0x60] sm:$0xff] %v443
  %460 = vst [vmem:[#allocation2 + $0x68] sm:$0xff] %v444
  %461 = vst [vmem:[#allocation2 + $0x70] sm:$0xff] %v445
  %462 = vst [vmem:[#allocation2 + $0x78] sm:$0xff] %v446
  // Predicated region
  $region18: #{rgcn_forward.7} parent=0 // pred_check
    %p463 = pneg %p37
  $region19: #{rgcn_forward.7} parent=0 // pred_check_branch
    %465 = sbr.rel (%p463) target = $region21
  $region20: #{rgcn_forward.7} parent=0 // pred_region
    %v466 = vld [vmem:[#allocation2] sm:$0xff]
    %v467 = vld [vmem:[#allocation2 + $0x8] sm:$0xff]
    %v468 = vld [vmem:[#allocation2 + $0x10] sm:$0xff]
    %v469 = vld [vmem:[#allocation2 + $0x18] sm:$0xff]
    %v470 = vld [vmem:[#allocation2 + $0x20] sm:$0xff]
    %v471 = vld [vmem:[#allocation2 + $0x28] sm:$0xff]
    %v472 = vld [vmem:[#allocation2 + $0x30] sm:$0xff]
    %v473 = vld [vmem:[#allocation2 + $0x38] sm:$0xff]
    %v474 = vld [vmem:[#allocation2 + $0x40] sm:$0xff]
    %v475 = vld [vmem:[#allocation2 + $0x48] sm:$0xff]
    %v476 = vld [vmem:[#allocation2 + $0x50] sm:$0xff]
    %v477 = vld [vmem:[#allocation2 + $0x58] sm:$0xff]
    %v478 = vld [vmem:[#allocation2 + $0x60] sm:$0xff]
    %v479 = vld [vmem:[#allocation2 + $0x68] sm:$0xff]
    %v480 = vld [vmem:[#allocation2 + $0x70] sm:$0xff]
    %v481 = vld [vmem:[#allocation2 + $0x78] sm:$0xff]
    %482 = vst [vmem:[%s3] sm:$0xff] %v466
    %483 = vst [vmem:[%s3 + $0x8] sm:$0xff] %v467
    %484 = vst [vmem:[%s3 + $0x10] sm:$0xff] %v468
    %485 = vst [vmem:[%s3 + $0x18] sm:$0xff] %v469
    %486 = vst [vmem:[%s3 + $0x20] sm:$0xff] %v470
    %487 = vst [vmem:[%s3 + $0x28] sm:$0xff] %v471
    %488 = vst [vmem:[%s3 + $0x30] sm:$0xff] %v472
    %489 = vst [vmem:[%s3 + $0x38] sm:$0xff] %v473
    %490 = vst [vmem:[%s3 + $0x40] sm:$0xff] %v474
    %491 = vst [vmem:[%s3 + $0x48] sm:$0xff] %v475
    %492 = vst [vmem:[%s3 + $0x50] sm:$0xff] %v476
    %493 = vst [vmem:[%s3 + $0x58] sm:$0xff] %v477
    %494 = vst [vmem:[%s3 + $0x60] sm:$0xff] %v478
    %495 = vst [vmem:[%s3 + $0x68] sm:$0xff] %v479
    %496 = vst [vmem:[%s3 + $0x70] sm:$0xff] %v480
    %497 = vst [vmem:[%s3 + $0x78] sm:$0xff] %v481
  $region21: #{rgcn_forward.7} parent=0 // pred_fallthru
    _
  // Predicated region
  $region22: #{rgcn_forward.7} parent=0 // pred_check
    _
  $region23: #{rgcn_forward.7} parent=0 // pred_check_branch
    %499 = sbr.rel (0) target = $region25
  $region24: #{rgcn_forward.7} parent=0 // pred_region
    _
  $region25: #{rgcn_forward.7} parent=0 // pred_fallthru
    _
  // Predicated region
  $region26: #{rgcn_forward.7} parent=0 // pred_check
    _
  $region27: #{rgcn_forward.7} parent=0 // pred_check_branch
    %501 = sbr.rel (0) target = $region29
  $region28: #{rgcn_forward.7} parent=0 // pred_region
    _
  $region29: #{rgcn_forward.7} parent=0 // pred_fallthru
    _

</llo_original>
